<compile_context>
chip_gen: v7x
topology: tpu7x:2x2x1
jax: 0.10.0
libtpu: 0.0.40
codegen_flags: <defaults>
</compile_context>

<pallas_src>
import functools

import jax
import jax.numpy as jnp
from jax.experimental import pallas as pl
from jax.experimental.pallas import tpu as pltpu


def _round_up(x, m):
    return (x + m - 1) // m * m


def _cdiv(a, b):
    return (a + b - 1) // b


def _tpu_defaults():
    """Generation-aware defaults: (tile_p, vmem_limit_bytes, k_fill, num_tensorcores)."""
    vmem_cap = 64 * 1024 * 1024                    # conservative fallback (v7x per-TC VMEM)
    try:
        vmem_cap = int(pltpu.get_tpu_info().vmem_capacity_bytes)
    except Exception:
        pass
    kind = ""
    try:
        kind = jax.devices()[0].device_kind.lower()
    except Exception:
        pass
    k_fill = 128 if "v5" in kind else 256          # MXU contraction fill target
    num_tc = 2 if ("v7" in kind or "7x" in kind) else 1
    if vmem_cap >= 100 * 1024 * 1024:              # v5e / v6e: 128 MiB VMEM per TC
        return 2048, 96 * 1024 * 1024, k_fill, num_tc
    return 1024, 40 * 1024 * 1024, k_fill, num_tc  # v7x: 64 MiB per-TC VMEM


def _conv_kernel(x_hbm, w_ref, b_ref, o_ref, *scratch, tp, in_len, tap_groups,
                 cin_p, t_per_chunk, use_col):
    """One (batch, spatial-chunk, tile-in-chunk) grid step.

    x_hbm : (N, Cin_p, P_in)      bf16, HBM (pl.ANY) -- manual halo DMA
    w_ref : (G, Cout_p, Kg)       bf16, VMEM resident (per-tap-group weights)
    b_ref : (Cout_p, 1)           f32,  VMEM resident
    o_ref : (1, Cout_p, TP)       output tile
    scratch: xbuf (2, Cin_p, IN_LEN) bf16   double-buffered activation slab
             [col (G*Kg, TP) bf16]          folded-tap scratch (only if use_col)
             acc (Cout_p, TP) f32           accumulator
             sem  DMA (2,)
    """
    if use_col:
        xbuf, col_ref, acc_ref, sem = scratch
    else:
        xbuf, acc_ref, sem = scratch
        col_ref = None

    b = pl.program_id(0)
    c = pl.program_id(1)
    t = pl.program_id(2)

    def tile_copy(t_idx, slot):
        start = pl.multiple_of((c * t_per_chunk + t_idx) * tp, 128)
        return pltpu.make_async_copy(
            x_hbm.at[b, :, pl.ds(start, in_len)],
            xbuf.at[slot],
            sem.at[slot],
        )

    slot = t % 2

    # Prime the pipeline at the start of each (batch, chunk) row.  Priming per chunk keeps the
    # manual double buffer correct under ANY megacore partitioning of the two "parallel" axes.
    # TODO(synk): cross-row prefetch (starting (b, c, 0) from the previous row's last step) would
    # hide this one exposed DMA per row, but the previous row may run on the other TensorCore when
    # the parallel axes are split, so it is intentionally not done.
    @pl.when(t == 0)
    def _():
        tile_copy(t, slot).start()

    # Wait for the current tile's slab (started here if t == 0, else prefetched at t-1),
    # then prefetch the next tile of this chunk into the other slot.
    tile_copy(t, slot).wait()

    @pl.when(t + 1 < t_per_chunk)
    def _():
        tile_copy(t + 1, 1 - slot).start()

    # Per-tap-group accumulated GEMMs straight off the VMEM slab.  Each partial dot depends only
    # on its own tap views / col rows, so building the next group's inputs overlaps the MXU.
    slab = xbuf.at[slot]                              # (Cin_p, IN_LEN) view
    for g, taps in enumerate(tap_groups):             # static, small (<= KH*KW groups)
        if col_ref is None:                           # Cin_p alone fills the MXU: no im2col
            d = taps[0]
            rhs = slab[:, d:d + tp]
        else:                                         # fold a few taps to fill the contraction
            gs = len(taps)
            base = g * gs * cin_p
            for j, d in enumerate(taps):
                col_ref[base + j * cin_p:base + (j + 1) * cin_p, :] = slab[:, d:d + tp]
            rhs = col_ref[base:base + gs * cin_p, :]
        part = jnp.dot(w_ref[g], rhs, preferred_element_type=jnp.float32)
        if g == 0:
            acc_ref[...] = part
        else:
            acc_ref[...] += part

    o_ref[0] = (acc_ref[...] + b_ref[...]).astype(o_ref.dtype)


def meta_conv2d(x_nchw, weight_oihw, bias, *, stride=(1, 1), padding=(1, 1),
                dilation=(1, 1), groups=1, tile_p=None, split_spatial=None):
    """Forward pass of MetaConv2d: F.conv2d(x, weight, bias, stride, padding, dilation, groups)."""
    if isinstance(stride, int):
        stride = (stride, stride)
    if isinstance(padding, int):
        padding = (padding, padding)
    if isinstance(dilation, int):
        dilation = (dilation, dilation)
    assert tuple(stride) == (1, 1), "only stride=1 implemented"
    assert tuple(dilation) == (1, 1), "only dilation=1 implemented"
    assert groups == 1, "only groups=1 implemented"

    n, cin, h, w = x_nchw.shape
    cout, cin_w, kh, kw = weight_oihw.shape
    assert cin_w == cin
    ph, pw = padding
    h_out = h + 2 * ph - kh + 1
    w_out = w + 2 * pw - kw + 1
    hp, wp = h + 2 * ph, w + 2 * pw
    kk = kh * kw
    out_dtype = x_nchw.dtype
    out_isize = jnp.dtype(out_dtype).itemsize

    tile_p_default, vmem_limit, k_fill, num_tc = _tpu_defaults()
    if tile_p is None:
        tile_p = tile_p_default

    # bf16 packs 16 sublanes: round both channel dims to 16.
    cin_p = _round_up(cin, 16)
    cout_p = _round_up(cout, 16)

    # Tap grouping: fold just enough taps so the GEMM contraction ~fills the MXU; once cin_p alone
    # is big enough (>= k_fill) go fully per-tap (gs == 1) and skip the col scratch entirely.
    if kk > 1:
        ngroups = min(kk, max(2, _cdiv(kk * cin_p, k_fill)))
    else:
        ngroups = 1
    gs = _cdiv(kk, ngroups)
    kg = gs * cin_p
    use_col = gs > 1

    deltas = [i * wp + j for i in range(kh) for j in range(kw)]
    delta_max = max(deltas)
    # Pad the tap list so every group has exactly gs taps; padded taps get zero weights below.
    deltas_pad = deltas + [deltas[-1]] * (ngroups * gs - kk)
    tap_groups = tuple(tuple(deltas_pad[g * gs:(g + 1) * gs]) for g in range(ngroups))

    # Flat-spatial tiling: output flat index p = y*Wp + x; garbage columns at x >= W_out are
    # computed but cropped after the kernel.
    p_need = h_out * wp
    tp = min(_round_up(tile_p, 128), _round_up(p_need, 128))

    # Generation-aware VMEM budget: shrink the spatial tile until the scratch estimate fits.
    def scratch_bytes(tp_):
        in_len_ = _round_up(tp_ + delta_max, 128)
        tot = 2 * cin_p * in_len_ * 2              # activation slab, double-buffered, bf16
        tot += cout_p * tp_ * 4                    # f32 accumulator
        if use_col:
            tot += ngroups * kg * tp_ * 2          # folded-tap scratch
        tot += 2 * ngroups * cout_p * kg * 2       # resident weight (2 pipeline buffers)
        # TODO(synk): single-buffer the constant-index weight/bias blocks (pl.Buffered(1)) to
        # halve the weight term; kept double-buffered here to avoid relying on that path.
        tot += 2 * cout_p * tp_ * out_isize        # output tile, double-buffered
        tot += 2 * cout_p * 4                      # bias
        return tot

    budget = vmem_limit - 2 * 1024 * 1024
    while tp > 128 and scratch_bytes(tp) > budget:
        tp = max(128, _round_up(tp // 2, 128))

    num_t = _cdiv(p_need, tp)

    # Optional 2-way core split of the spatial-tile axis: v7x has two TensorCores, and with
    # batch == 1 (or odd batch) the batch axis alone leaves a core idle / imbalanced.
    if split_spatial is not None:
        n_split = max(1, min(int(split_spatial), num_t))
    else:
        n_split = 2 if (num_tc >= 2 and num_t >= 2 and n % num_tc != 0) else 1
    t_per_chunk = _cdiv(num_t, n_split)
    num_t_eff = n_split * t_per_chunk

    in_len = _round_up(tp + delta_max, 128)        # slab length incl. conv halo
    p_comp = num_t_eff * tp
    p_in = (num_t_eff - 1) * tp + in_len           # flat length the kernel may read

    # One padded bf16 activation copy in HBM: channels -> cin_p, spatial halo, plus extra zero
    # rows at the bottom so every in-kernel slab read stays in bounds.
    # TODO(synk): move halo zeroing into the kernel (memset xbuf + DMA interior rows only) to
    # avoid this extra HBM pass for large early-layer activations.
    extra_h = _cdiv(max(0, p_in - hp * wp), wp)
    x_pad = jnp.pad(x_nchw.astype(jnp.bfloat16),
                    ((0, 0), (0, cin_p - cin), (ph, ph + extra_h), (pw, pw)))
    x_flat = x_pad.reshape(n, cin_p, (hp + extra_h) * wp)

    # Weight: (Cout,Cin,KH,KW) -> per-tap (KK,Cout_p,Cin_p) -> tap groups (G, Cout_p, gs*Cin_p).
    # Column index inside a group = j*Cin_p + c, matching the kernel's col/rhs layout; padded
    # (duplicate) taps get zero weights so they contribute nothing.
    w_taps = jnp.transpose(weight_oihw, (2, 3, 0, 1)).reshape(kk, cout, cin)
    w_taps = jnp.pad(w_taps, ((0, 0), (0, cout_p - cout), (0, cin_p - cin)))
    if use_col:
        w_g = jnp.pad(w_taps, ((0, ngroups * gs - kk), (0, 0), (0, 0)))
        w_g = w_g.reshape(ngroups, gs, cout_p, cin_p).transpose(0, 2, 1, 3)
        w_g = w_g.reshape(ngroups, cout_p, kg)
    else:
        w_g = w_taps                                # (kk, cout_p, cin_p), gs == 1
    w_g = w_g.astype(jnp.bfloat16)

    if bias is None:
        b2d = jnp.zeros((cout_p, 1), jnp.float32)
    else:
        b2d = jnp.pad(bias.astype(jnp.float32), (0, cout_p - cout)).reshape(cout_p, 1)

    kernel = functools.partial(_conv_kernel, tp=tp, in_len=in_len, tap_groups=tap_groups,
                               cin_p=cin_p, t_per_chunk=t_per_chunk, use_col=use_col)

    scratch_shapes = [pltpu.VMEM((2, cin_p, in_len), jnp.bfloat16)]   # double-buffered slab
    if use_col:
        scratch_shapes.append(pltpu.VMEM((ngroups * kg, tp), jnp.bfloat16))
    scratch_shapes += [pltpu.VMEM((cout_p, tp), jnp.float32),         # f32 accumulator
                       pltpu.SemaphoreType.DMA((2,))]

    flops = 2 * n * cout_p * p_comp * ngroups * kg
    bytes_accessed = (n * num_t_eff * cin_p * in_len * 2              # activation DMAs
                      + ngroups * cout_p * kg * 2                     # weight
                      + n * cout_p * p_comp * out_isize)              # output

    out_flat = pl.pallas_call(
        kernel,
        out_shape=jax.ShapeDtypeStruct((n, cout_p, p_comp), out_dtype),
        grid_spec=pltpu.PrefetchScalarGridSpec(
            num_scalar_prefetch=0,
            grid=(n, n_split, t_per_chunk),
            in_specs=[
                pl.BlockSpec(memory_space=pl.ANY),                    # activation stays in HBM
                pl.BlockSpec((ngroups, cout_p, kg), lambda b, c, t: (0, 0, 0)),
                pl.BlockSpec((cout_p, 1), lambda b, c, t: (0, 0)),
            ],
            out_specs=pl.BlockSpec((1, cout_p, tp),
                                   lambda b, c, t: (b, 0, c * t_per_chunk + t)),
            scratch_shapes=scratch_shapes,
        ),
        compiler_params=pltpu.CompilerParams(
            dimension_semantics=("parallel", "parallel", "arbitrary"),
            vmem_limit_bytes=vmem_limit),
        cost_estimate=pl.CostEstimate(flops=flops, transcendentals=0,
                                      bytes_accessed=bytes_accessed),
    )(x_flat, w_g, b2d)

    # (N, Cout, H_out*Wp) is already channel-major NCHW: drop padded channels / garbage columns.
    # TODO(synk): fuse this crop into the consumer (or keep the padded layout) to avoid an extra
    # HBM read/write of the whole output.
    out = out_flat[:, :cout, :h_out * wp].reshape(n, cout, h_out, wp)
    return out[:, :, :, :w_out]


def _check(key, *, n, cin, h, w, cout, kh, kw, pad, use_bias, **conv_kwargs):
    k_w, k_b, k_x = jax.random.split(key, 3)
    fan_in = cin * kh * kw
    bound = 1.0 / (fan_in ** 0.5)                  # nn.Conv2d default init bound
    weight = jax.random.uniform(k_w, (cout, cin, kh, kw), jnp.float32,
                                minval=-bound, maxval=bound)
    bias = (jax.random.uniform(k_b, (cout,), jnp.float32, minval=-bound, maxval=bound)
            if use_bias else None)
    x = jax.random.normal(k_x, (n, cin, h, w), jnp.float32)

    fwd = jax.jit(functools.partial(meta_conv2d, stride=(1, 1), padding=(pad, pad),
                                    **conv_kwargs))
    out = jax.block_until_ready(fwd(x, weight, bias))

    # Reference with the same bf16 matmul inputs / f32 accumulation semantics.
    ref = jax.lax.conv_general_dilated(
        x.astype(jnp.bfloat16), weight.astype(jnp.bfloat16),
        window_strides=(1, 1), padding=((pad, pad), (pad, pad)),
        dimension_numbers=("NCHW", "OIHW", "NCHW"),
        preferred_element_type=jnp.float32)
    if bias is not None:
        ref = ref + bias[None, :, None, None]

    assert out.shape == ref.shape, (out.shape, ref.shape)
    max_err = float(jnp.max(jnp.abs(out.astype(jnp.float32) - ref)))
    assert jnp.allclose(out.astype(jnp.float32), ref, atol=1e-2, rtol=1e-2), \
        f"mismatch vs reference (max err {max_err}) for n={n} cin={cin} h={h} cout={cout}"


if __name__ == "__main__":
    key = jax.random.PRNGKey(0)
    k1, k2, k3 = jax.random.split(key, 3)

    # 1) Small VGG-style block: 3x3 / stride 1 / pad 1, with bias (grouped-tap small-Cin path).
    _check(k1, n=2, cin=4, h=16, w=16, cout=8, kh=3, kw=3, pad=1, use_bias=True)

    # 2) Chunked spatial grid: forced 2-way split of the tile axis (uneven tile count -> padded
    #    chunk), multi-tile prefetch within a chunk, and bias=None.
    _check(k2, n=1, cin=8, h=24, w=24, cout=16, kh=3, kw=3, pad=1, use_bias=False,
           tile_p=256, split_spatial=2)

    # 3) Wide-channel layer exercising the per-tap (no-im2col) accumulation path.
    _check(k3, n=1, cin=256, h=8, w=8, cout=32, kh=3, kw=3, pad=1, use_bias=True)

    print("KERNEL_OK")
</pallas_src>

<mosaic_0001>
module attributes {stable_mosaic.version = 11 : i64} {
  func.func @_conv_kernel(%arg0: i32, %arg1: i32, %arg2: i32, %arg3: memref<2x16x522xbf16, #tpu.memory_space<any>>, %arg4: memref<2x16x80xbf16, #tpu.memory_space<vmem>>, %arg5: memref<16x1xf32, #tpu.memory_space<vmem>>, %arg6: memref<1x16x384xf32, #tpu.memory_space<vmem>>, %arg7: memref<2x16x512xbf16, #tpu.memory_space<vmem>>, %arg8: memref<160x384xbf16, #tpu.memory_space<vmem>>, %arg9: memref<16x384xf32, #tpu.memory_space<vmem>>, %arg10: memref<2x!tpu.dma_semaphore, #tpu.memory_space<semaphore_mem>>) attributes {dimension_semantics = [#tpu.dimension_semantics<parallel>, #tpu.dimension_semantics<parallel>, #tpu.dimension_semantics<arbitrary>], iteration_bounds = array<i64: 2, 1, 1>, scalar_prefetch = 0 : i64, scratch_operands = 4 : i64, tpu.core_type = #tpu.core_type<tc>, window_params = [{}, {pipeline_mode = #tpu.pipeline_mode<synchronous>, transform_indices = @transform_1, window_bounds = array<i64: 2, 16, 80>}, {pipeline_mode = #tpu.pipeline_mode<synchronous>, transform_indices = @transform_2, window_bounds = array<i64: 16, 1>}, {transform_indices = @transform_3, window_bounds = array<i64: 1, 16, 384>}]} {
    %c2_i32 = arith.constant 2 : i32
    %c0_i32 = arith.constant 0 : i32
    %0 = arith.cmpi eq, %c2_i32, %c0_i32 : i32
    %c1_i32 = arith.constant 1 : i32
    %1 = arith.select %0, %c1_i32, %c2_i32 : i32
    %2 = arith.remsi %arg2, %1 : i32
    %c0_i32_0 = arith.constant 0 : i32
    %3 = arith.cmpi ne, %2, %c0_i32_0 : i32
    %c0_i32_1 = arith.constant 0 : i32
    %4 = arith.cmpi slt, %2, %c0_i32_1 : i32
    %c0_i32_2 = arith.constant 0 : i32
    %5 = arith.cmpi slt, %1, %c0_i32_2 : i32
    %6 = arith.xori %4, %5 : i1
    %7 = arith.andi %6, %3 : i1
    %8 = arith.addi %2, %1 : i32
    %9 = arith.select %7, %8, %2 : i32
    %c0_i32_3 = arith.constant 0 : i32
    %10 = arith.cmpi eq, %arg2, %c0_i32_3 : i32
    %11 = arith.extui %10 : i1 to i32
    %c0_i32_4 = arith.constant 0 : i32
    %12 = arith.cmpi ne, %11, %c0_i32_4 : i32
    scf.if %12 {
      %c1_i32_78 = arith.constant 1 : i32
      %86 = arith.muli %arg1, %c1_i32_78 : i32
      %87 = arith.addi %86, %arg2 : i32
      %c384_i32_79 = arith.constant 384 : i32
      %88 = arith.muli %87, %c384_i32_79 : i32
      %89 = tpu.assume_multiple %88, 128 : i32
      %c0_i32_80 = arith.constant 0 : i32
      %90 = tpu.memref_slice %arg3[%arg0, %c0_i32_80, %89] : memref<2x16x522xbf16, #tpu.memory_space<any>> -> memref<1x16x512xbf16, #tpu.memory_space<any>>
      %91 = tpu.memref_squeeze %90 : memref<1x16x512xbf16, #tpu.memory_space<any>> -> memref<16x512xbf16, #tpu.memory_space<any>>
      %c0_i32_81 = arith.constant 0 : i32
      %c0_i32_82 = arith.constant 0 : i32
      %92 = tpu.memref_slice %arg7[%9, %c0_i32_81, %c0_i32_82] : memref<2x16x512xbf16, #tpu.memory_space<vmem>> -> memref<1x16x512xbf16, #tpu.memory_space<vmem>>
      %93 = tpu.memref_squeeze %92 : memref<1x16x512xbf16, #tpu.memory_space<vmem>> -> memref<16x512xbf16, #tpu.memory_space<vmem>>
      %94 = tpu.memref_slice %arg10[%9] : memref<2x!tpu.dma_semaphore, #tpu.memory_space<semaphore_mem>> -> memref<1x!tpu.dma_semaphore, #tpu.memory_space<semaphore_mem>>
      %95 = tpu.memref_squeeze %94 : memref<1x!tpu.dma_semaphore, #tpu.memory_space<semaphore_mem>> -> memref<!tpu.dma_semaphore, #tpu.memory_space<semaphore_mem>>
      tpu.enqueue_dma source(%91 : memref<16x512xbf16, #tpu.memory_space<any>>) target(%93 : memref<16x512xbf16, #tpu.memory_space<vmem>>) target_semaphore(%95 : memref<!tpu.dma_semaphore, #tpu.memory_space<semaphore_mem>>)
    } else {
    }
    %c1_i32_5 = arith.constant 1 : i32
    %13 = arith.muli %arg1, %c1_i32_5 : i32
    %14 = arith.addi %13, %arg2 : i32
    %c384_i32 = arith.constant 384 : i32
    %15 = arith.muli %14, %c384_i32 : i32
    %16 = tpu.assume_multiple %15, 128 : i32
    %c0_i32_6 = arith.constant 0 : i32
    %17 = tpu.memref_slice %arg3[%arg0, %c0_i32_6, %16] : memref<2x16x522xbf16, #tpu.memory_space<any>> -> memref<1x16x512xbf16, #tpu.memory_space<any>>
    %18 = tpu.memref_squeeze %17 : memref<1x16x512xbf16, #tpu.memory_space<any>> -> memref<16x512xbf16, #tpu.memory_space<any>>
    %c0_i32_7 = arith.constant 0 : i32
    %c0_i32_8 = arith.constant 0 : i32
    %19 = tpu.memref_slice %arg7[%9, %c0_i32_7, %c0_i32_8] : memref<2x16x512xbf16, #tpu.memory_space<vmem>> -> memref<1x16x512xbf16, #tpu.memory_space<vmem>>
    %20 = tpu.memref_squeeze %19 : memref<1x16x512xbf16, #tpu.memory_space<vmem>> -> memref<16x512xbf16, #tpu.memory_space<vmem>>
    %21 = tpu.memref_slice %arg10[%9] : memref<2x!tpu.dma_semaphore, #tpu.memory_space<semaphore_mem>> -> memref<1x!tpu.dma_semaphore, #tpu.memory_space<semaphore_mem>>
    %22 = tpu.memref_squeeze %21 : memref<1x!tpu.dma_semaphore, #tpu.memory_space<semaphore_mem>> -> memref<!tpu.dma_semaphore, #tpu.memory_space<semaphore_mem>>
    tpu.wait_dma2 semaphore(%22 : memref<!tpu.dma_semaphore, #tpu.memory_space<semaphore_mem>>) src(%18 : memref<16x512xbf16, #tpu.memory_space<any>>) dst(%20 : memref<16x512xbf16, #tpu.memory_space<vmem>>)
    %c1_i32_9 = arith.constant 1 : i32
    %23 = arith.addi %arg2, %c1_i32_9 : i32
    %c1_i32_10 = arith.constant 1 : i32
    %24 = arith.cmpi slt, %23, %c1_i32_10 : i32
    %25 = arith.extui %24 : i1 to i32
    %c0_i32_11 = arith.constant 0 : i32
    %26 = arith.cmpi ne, %25, %c0_i32_11 : i32
    scf.if %26 {
      %c1_i32_78 = arith.constant 1 : i32
      %86 = arith.addi %arg2, %c1_i32_78 : i32
      %c1_i32_79 = arith.constant 1 : i32
      %87 = arith.subi %c1_i32_79, %9 : i32
      %c1_i32_80 = arith.constant 1 : i32
      %88 = arith.muli %arg1, %c1_i32_80 : i32
      %89 = arith.addi %88, %86 : i32
      %c384_i32_81 = arith.constant 384 : i32
      %90 = arith.muli %89, %c384_i32_81 : i32
      %91 = tpu.assume_multiple %90, 128 : i32
      %c0_i32_82 = arith.constant 0 : i32
      %92 = tpu.memref_slice %arg3[%arg0, %c0_i32_82, %91] : memref<2x16x522xbf16, #tpu.memory_space<any>> -> memref<1x16x512xbf16, #tpu.memory_space<any>>
      %93 = tpu.memref_squeeze %92 : memref<1x16x512xbf16, #tpu.memory_space<any>> -> memref<16x512xbf16, #tpu.memory_space<any>>
      %c0_i32_83 = arith.constant 0 : i32
      %c0_i32_84 = arith.constant 0 : i32
      %94 = tpu.memref_slice %arg7[%87, %c0_i32_83, %c0_i32_84] : memref<2x16x512xbf16, #tpu.memory_space<vmem>> -> memref<1x16x512xbf16, #tpu.memory_space<vmem>>
      %95 = tpu.memref_squeeze %94 : memref<1x16x512xbf16, #tpu.memory_space<vmem>> -> memref<16x512xbf16, #tpu.memory_space<vmem>>
      %96 = tpu.memref_slice %arg10[%87] : memref<2x!tpu.dma_semaphore, #tpu.memory_space<semaphore_mem>> -> memref<1x!tpu.dma_semaphore, #tpu.memory_space<semaphore_mem>>
      %97 = tpu.memref_squeeze %96 : memref<1x!tpu.dma_semaphore, #tpu.memory_space<semaphore_mem>> -> memref<!tpu.dma_semaphore, #tpu.memory_space<semaphore_mem>>
      tpu.enqueue_dma source(%93 : memref<16x512xbf16, #tpu.memory_space<any>>) target(%95 : memref<16x512xbf16, #tpu.memory_space<vmem>>) target_semaphore(%97 : memref<!tpu.dma_semaphore, #tpu.memory_space<semaphore_mem>>)
    } else {
    }
    %c0_i32_12 = arith.constant 0 : i32
    %c0_i32_13 = arith.constant 0 : i32
    %27 = tpu.memref_slice %arg7[%9, %c0_i32_12, %c0_i32_13] : memref<2x16x512xbf16, #tpu.memory_space<vmem>> -> memref<1x16x512xbf16, #tpu.memory_space<vmem>>
    %28 = tpu.memref_squeeze %27 : memref<1x16x512xbf16, #tpu.memory_space<vmem>> -> memref<16x512xbf16, #tpu.memory_space<vmem>>
    %c0 = arith.constant 0 : index
    %c0_14 = arith.constant 0 : index
    %29 = vector.load %28[%c0, %c0_14] : memref<16x512xbf16, #tpu.memory_space<vmem>>, vector<16x384xbf16>
    %c0_15 = arith.constant 0 : index
    %c0_16 = arith.constant 0 : index
    %30 = vector.load %arg8[%c0_15, %c0_16] : memref<160x384xbf16, #tpu.memory_space<vmem>>, vector<16x384xbf16>
    tpu.vector_store %arg8[%c0_15, %c0_16], %29 {strides = array<i32>} : memref<160x384xbf16, #tpu.memory_space<vmem>>, vector<16x384xbf16>,
    %c0_i32_17 = arith.constant 0 : i32
    %c0_i32_18 = arith.constant 0 : i32
    %31 = tpu.memref_slice %arg7[%9, %c0_i32_17, %c0_i32_18] : memref<2x16x512xbf16, #tpu.memory_space<vmem>> -> memref<1x16x512xbf16, #tpu.memory_space<vmem>>
    %32 = tpu.memref_squeeze %31 : memref<1x16x512xbf16, #tpu.memory_space<vmem>> -> memref<16x512xbf16, #tpu.memory_space<vmem>>
    %c0_19 = arith.constant 0 : index
    %c1 = arith.constant 1 : index
    %33 = vector.load %32[%c0_19, %c1] : memref<16x512xbf16, #tpu.memory_space<vmem>>, vector<16x384xbf16>
    %c16 = arith.constant 16 : index
    %c0_20 = arith.constant 0 : index
    %34 = vector.load %arg8[%c16, %c0_20] : memref<160x384xbf16, #tpu.memory_space<vmem>>, vector<16x384xbf16>
    tpu.vector_store %arg8[%c16, %c0_20], %33 {strides = array<i32>} : memref<160x384xbf16, #tpu.memory_space<vmem>>, vector<16x384xbf16>,
    %c0_i32_21 = arith.constant 0 : i32
    %c0_i32_22 = arith.constant 0 : i32
    %35 = tpu.memref_slice %arg7[%9, %c0_i32_21, %c0_i32_22] : memref<2x16x512xbf16, #tpu.memory_space<vmem>> -> memref<1x16x512xbf16, #tpu.memory_space<vmem>>
    %36 = tpu.memref_squeeze %35 : memref<1x16x512xbf16, #tpu.memory_space<vmem>> -> memref<16x512xbf16, #tpu.memory_space<vmem>>
    %c0_23 = arith.constant 0 : index
    %c2 = arith.constant 2 : index
    %37 = vector.load %36[%c0_23, %c2] : memref<16x512xbf16, #tpu.memory_space<vmem>>, vector<16x384xbf16>
    %c32 = arith.constant 32 : index
    %c0_24 = arith.constant 0 : index
    %38 = vector.load %arg8[%c32, %c0_24] : memref<160x384xbf16, #tpu.memory_space<vmem>>, vector<16x384xbf16>
    tpu.vector_store %arg8[%c32, %c0_24], %37 {strides = array<i32>} : memref<160x384xbf16, #tpu.memory_space<vmem>>, vector<16x384xbf16>,
    %c0_i32_25 = arith.constant 0 : i32
    %c0_i32_26 = arith.constant 0 : i32
    %39 = tpu.memref_slice %arg7[%9, %c0_i32_25, %c0_i32_26] : memref<2x16x512xbf16, #tpu.memory_space<vmem>> -> memref<1x16x512xbf16, #tpu.memory_space<vmem>>
    %40 = tpu.memref_squeeze %39 : memref<1x16x512xbf16, #tpu.memory_space<vmem>> -> memref<16x512xbf16, #tpu.memory_space<vmem>>
    %c0_27 = arith.constant 0 : index
    %c18 = arith.constant 18 : index
    %41 = vector.load %40[%c0_27, %c18] : memref<16x512xbf16, #tpu.memory_space<vmem>>, vector<16x384xbf16>
    %c48 = arith.constant 48 : index
    %c0_28 = arith.constant 0 : index
    %42 = vector.load %arg8[%c48, %c0_28] : memref<160x384xbf16, #tpu.memory_space<vmem>>, vector<16x384xbf16>
    tpu.vector_store %arg8[%c48, %c0_28], %41 {strides = array<i32>} : memref<160x384xbf16, #tpu.memory_space<vmem>>, vector<16x384xbf16>,
    %c0_i32_29 = arith.constant 0 : i32
    %c0_i32_30 = arith.constant 0 : i32
    %43 = tpu.memref_slice %arg7[%9, %c0_i32_29, %c0_i32_30] : memref<2x16x512xbf16, #tpu.memory_space<vmem>> -> memref<1x16x512xbf16, #tpu.memory_space<vmem>>
    %44 = tpu.memref_squeeze %43 : memref<1x16x512xbf16, #tpu.memory_space<vmem>> -> memref<16x512xbf16, #tpu.memory_space<vmem>>
    %c0_31 = arith.constant 0 : index
    %c19 = arith.constant 19 : index
    %45 = vector.load %44[%c0_31, %c19] : memref<16x512xbf16, #tpu.memory_space<vmem>>, vector<16x384xbf16>
    %c64 = arith.constant 64 : index
    %c0_32 = arith.constant 0 : index
    %46 = vector.load %arg8[%c64, %c0_32] : memref<160x384xbf16, #tpu.memory_space<vmem>>, vector<16x384xbf16>
    tpu.vector_store %arg8[%c64, %c0_32], %45 {strides = array<i32>} : memref<160x384xbf16, #tpu.memory_space<vmem>>, vector<16x384xbf16>,
    %c0_33 = arith.constant 0 : index
    %c0_34 = arith.constant 0 : index
    %47 = vector.load %arg8[%c0_33, %c0_34] : memref<160x384xbf16, #tpu.memory_space<vmem>>, vector<80x384xbf16>
    %c0_35 = arith.constant 0 : index
    %c0_36 = arith.constant 0 : index
    %c0_37 = arith.constant 0 : index
    %48 = vector.load %arg4[%c0_35, %c0_36, %c0_37] : memref<2x16x80xbf16, #tpu.memory_space<vmem>>, vector<1x16x80xbf16>
    %49 = vector.shape_cast %48 : vector<1x16x80xbf16> to vector<16x80xbf16>
    %cst = arith.constant dense<0.000000e+00> : vector<16x384xf32>
    %50 = tpu.matmul %49, %47, %cst {dimension_numbers = #tpu.dot_dimension_numbers<[1], [0], [0], [1], [0, 0, 1, 1], [], []>} : vector<16x80xbf16>, vector<80x384xbf16>, vector<16x384xf32> -> vector<16x384xf32>
    %c0_38 = arith.constant 0 : index
    %c0_39 = arith.constant 0 : index
    %51 = vector.load %arg9[%c0_38, %c0_39] : memref<16x384xf32, #tpu.memory_space<vmem>>, vector<16x384xf32>
    tpu.vector_store %arg9[%c0_38, %c0_39], %50 {strides = array<i32>} : memref<16x384xf32, #tpu.memory_space<vmem>>, vector<16x384xf32>,
    %c0_i32_40 = arith.constant 0 : i32
    %c0_i32_41 = arith.constant 0 : i32
    %52 = tpu.memref_slice %arg7[%9, %c0_i32_40, %c0_i32_41] : memref<2x16x512xbf16, #tpu.memory_space<vmem>> -> memref<1x16x512xbf16, #tpu.memory_space<vmem>>
    %53 = tpu.memref_squeeze %52 : memref<1x16x512xbf16, #tpu.memory_space<vmem>> -> memref<16x512xbf16, #tpu.memory_space<vmem>>
    %c0_42 = arith.constant 0 : index
    %c20 = arith.constant 20 : index
    %54 = vector.load %53[%c0_42, %c20] : memref<16x512xbf16, #tpu.memory_space<vmem>>, vector<16x384xbf16>
    %c80 = arith.constant 80 : index
    %c0_43 = arith.constant 0 : index
    %55 = vector.load %arg8[%c80, %c0_43] : memref<160x384xbf16, #tpu.memory_space<vmem>>, vector<16x384xbf16>
    tpu.vector_store %arg8[%c80, %c0_43], %54 {strides = array<i32>} : memref<160x384xbf16, #tpu.memory_space<vmem>>, vector<16x384xbf16>,
    %c0_i32_44 = arith.constant 0 : i32
    %c0_i32_45 = arith.constant 0 : i32
    %56 = tpu.memref_slice %arg7[%9, %c0_i32_44, %c0_i32_45] : memref<2x16x512xbf16, #tpu.memory_space<vmem>> -> memref<1x16x512xbf16, #tpu.memory_space<vmem>>
    %57 = tpu.memref_squeeze %56 : memref<1x16x512xbf16, #tpu.memory_space<vmem>> -> memref<16x512xbf16, #tpu.memory_space<vmem>>
    %c0_46 = arith.constant 0 : index
    %c36 = arith.constant 36 : index
    %58 = vector.load %57[%c0_46, %c36] : memref<16x512xbf16, #tpu.memory_space<vmem>>, vector<16x384xbf16>
    %c96 = arith.constant 96 : index
    %c0_47 = arith.constant 0 : index
    %59 = vector.load %arg8[%c96, %c0_47] : memref<160x384xbf16, #tpu.memory_space<vmem>>, vector<16x384xbf16>
    tpu.vector_store %arg8[%c96, %c0_47], %58 {strides = array<i32>} : memref<160x384xbf16, #tpu.memory_space<vmem>>, vector<16x384xbf16>,
    %c0_i32_48 = arith.constant 0 : i32
    %c0_i32_49 = arith.constant 0 : i32
    %60 = tpu.memref_slice %arg7[%9, %c0_i32_48, %c0_i32_49] : memref<2x16x512xbf16, #tpu.memory_space<vmem>> -> memref<1x16x512xbf16, #tpu.memory_space<vmem>>
    %61 = tpu.memref_squeeze %60 : memref<1x16x512xbf16, #tpu.memory_space<vmem>> -> memref<16x512xbf16, #tpu.memory_space<vmem>>
    %c0_50 = arith.constant 0 : index
    %c37 = arith.constant 37 : index
    %62 = vector.load %61[%c0_50, %c37] : memref<16x512xbf16, #tpu.memory_space<vmem>>, vector<16x384xbf16>
    %c112 = arith.constant 112 : index
    %c0_51 = arith.constant 0 : index
    %63 = vector.load %arg8[%c112, %c0_51] : memref<160x384xbf16, #tpu.memory_space<vmem>>, vector<16x384xbf16>
    tpu.vector_store %arg8[%c112, %c0_51], %62 {strides = array<i32>} : memref<160x384xbf16, #tpu.memory_space<vmem>>, vector<16x384xbf16>,
    %c0_i32_52 = arith.constant 0 : i32
    %c0_i32_53 = arith.constant 0 : i32
    %64 = tpu.memref_slice %arg7[%9, %c0_i32_52, %c0_i32_53] : memref<2x16x512xbf16, #tpu.memory_space<vmem>> -> memref<1x16x512xbf16, #tpu.memory_space<vmem>>
    %65 = tpu.memref_squeeze %64 : memref<1x16x512xbf16, #tpu.memory_space<vmem>> -> memref<16x512xbf16, #tpu.memory_space<vmem>>
    %c0_54 = arith.constant 0 : index
    %c38 = arith.constant 38 : index
    %66 = vector.load %65[%c0_54, %c38] : memref<16x512xbf16, #tpu.memory_space<vmem>>, vector<16x384xbf16>
    %c128 = arith.constant 128 : index
    %c0_55 = arith.constant 0 : index
    %67 = vector.load %arg8[%c128, %c0_55] : memref<160x384xbf16, #tpu.memory_space<vmem>>, vector<16x384xbf16>
    tpu.vector_store %arg8[%c128, %c0_55], %66 {strides = array<i32>} : memref<160x384xbf16, #tpu.memory_space<vmem>>, vector<16x384xbf16>,
    %c0_i32_56 = arith.constant 0 : i32
    %c0_i32_57 = arith.constant 0 : i32
    %68 = tpu.memref_slice %arg7[%9, %c0_i32_56, %c0_i32_57] : memref<2x16x512xbf16, #tpu.memory_space<vmem>> -> memref<1x16x512xbf16, #tpu.memory_space<vmem>>
    %69 = tpu.memref_squeeze %68 : memref<1x16x512xbf16, #tpu.memory_space<vmem>> -> memref<16x512xbf16, #tpu.memory_space<vmem>>
    %c0_58 = arith.constant 0 : index
    %c38_59 = arith.constant 38 : index
    %70 = vector.load %69[%c0_58, %c38_59] : memref<16x512xbf16, #tpu.memory_space<vmem>>, vector<16x384xbf16>
    %c144 = arith.constant 144 : index
    %c0_60 = arith.constant 0 : index
    %71 = vector.load %arg8[%c144, %c0_60] : memref<160x384xbf16, #tpu.memory_space<vmem>>, vector<16x384xbf16>
    tpu.vector_store %arg8[%c144, %c0_60], %70 {strides = array<i32>} : memref<160x384xbf16, #tpu.memory_space<vmem>>, vector<16x384xbf16>,
    %c80_61 = arith.constant 80 : index
    %c0_62 = arith.constant 0 : index
    %72 = vector.load %arg8[%c80_61, %c0_62] : memref<160x384xbf16, #tpu.memory_space<vmem>>, vector<80x384xbf16>
    %c1_63 = arith.constant 1 : index
    %c0_64 = arith.constant 0 : index
    %c0_65 = arith.constant 0 : index
    %73 = vector.load %arg4[%c1_63, %c0_64, %c0_65] : memref<2x16x80xbf16, #tpu.memory_space<vmem>>, vector<1x16x80xbf16>
    %74 = vector.shape_cast %73 : vector<1x16x80xbf16> to vector<16x80xbf16>
    %cst_66 = arith.constant dense<0.000000e+00> : vector<16x384xf32>
    %75 = tpu.matmul %74, %72, %cst_66 {dimension_numbers = #tpu.dot_dimension_numbers<[1], [0], [0], [1], [0, 0, 1, 1], [], []>} : vector<16x80xbf16>, vector<80x384xbf16>, vector<16x384xf32> -> vector<16x384xf32>
    %c0_67 = arith.constant 0 : index
    %c0_68 = arith.constant 0 : index
    %76 = vector.load %arg9[%c0_67, %c0_68] : memref<16x384xf32, #tpu.memory_space<vmem>>, vector<16x384xf32>
    %77 = arith.addf %76, %75 : vector<16x384xf32>
    %c0_69 = arith.constant 0 : index
    %c0_70 = arith.constant 0 : index
    %78 = vector.load %arg9[%c0_69, %c0_70] : memref<16x384xf32, #tpu.memory_space<vmem>>, vector<16x384xf32>
    tpu.vector_store %arg9[%c0_69, %c0_70], %77 {strides = array<i32>} : memref<16x384xf32, #tpu.memory_space<vmem>>, vector<16x384xf32>,
    %c0_71 = arith.constant 0 : index
    %c0_72 = arith.constant 0 : index
    %79 = vector.load %arg9[%c0_71, %c0_72] : memref<16x384xf32, #tpu.memory_space<vmem>>, vector<16x384xf32>
    %c0_73 = arith.constant 0 : index
    %c0_74 = arith.constant 0 : index
    %80 = vector.load %arg5[%c0_73, %c0_74] : memref<16x1xf32, #tpu.memory_space<vmem>>, vector<16x1xf32>
    %81 = vector.broadcast %80 : vector<16x1xf32> to vector<16x384xf32>
    %82 = arith.addf %79, %81 : vector<16x384xf32>
    %c0_75 = arith.constant 0 : index
    %c0_76 = arith.constant 0 : index
    %c0_77 = arith.constant 0 : index
    %83 = vector.load %arg6[%c0_75, %c0_76, %c0_77] : memref<1x16x384xf32, #tpu.memory_space<vmem>>, vector<1x16x384xf32>
    %84 = vector.shape_cast %83 : vector<1x16x384xf32> to vector<16x384xf32>
    %85 = vector.shape_cast %82 : vector<16x384xf32> to vector<1x16x384xf32>
    tpu.vector_store %arg6[%c0_75, %c0_76, %c0_77], %85 {strides = array<i32>} : memref<1x16x384xf32, #tpu.memory_space<vmem>>, vector<1x16x384xf32>,
    return
  }
  func.func @transform_1(%arg0: i32, %arg1: i32, %arg2: i32) -> (i32, i32, i32) {
    %c0_i32 = arith.constant 0 : i32
    %c0_i32_0 = arith.constant 0 : i32
    %c0_i32_1 = arith.constant 0 : i32
    %c0_i32_2 = arith.constant 0 : i32
    return %c0_i32, %c0_i32_0, %c0_i32_1 : i32, i32, i32
  }
  func.func @transform_2(%arg0: i32, %arg1: i32, %arg2: i32) -> (i32, i32) {
    %c0_i32 = arith.constant 0 : i32
    %c0_i32_0 = arith.constant 0 : i32
    %c0_i32_1 = arith.constant 0 : i32
    return %c0_i32, %c0_i32_0 : i32, i32
  }
  func.func @transform_3(%arg0: i32, %arg1: i32, %arg2: i32) -> (i32, i32, i32) {
    %c1_i32 = arith.constant 1 : i32
    %0 = arith.muli %arg1, %c1_i32 : i32
    %1 = arith.addi %0, %arg2 : i32
    %c0_i32 = arith.constant 0 : i32
    %c0_i32_0 = arith.constant 0 : i32
    return %arg0, %c0_i32, %1 : i32, i32, i32
  }
}

</mosaic_0001>

<llo_original>
// kernel: meta_conv2d.1
$region0: #{meta_conv2d.1}
  #allocation0 [shape = 'u32[]', space=smem, size = 0x4, offset = 0x4, fixed_abs, tag = 'smem constant byte address 0x4 - core index']
  #allocation1 [shape = 'u32[144,128]{1,0:T(1,128)}', space=vmem, size = 0x12000, scoped, tag = 'internal scratch']
  #allocation2 [shape = 'bf16[2,16,512]{2,1,0:T(16,128)(2,1)}', space=vmem, size = 0x8000, scoped, tag = 'scratch operand']
  #allocation3 [shape = 'bf16[160,384]{1,0:T(16,128)(2,1)}', space=vmem, size = 0x1e000, scoped, tag = 'scratch operand']
  #allocation4 [shape = 'f32[16,384]{1,0:T(8,128)}', space=vmem, size = 0x6000, scoped, tag = 'scratch operand']
  #allocation5 [shape = 's32[2]{0}', space=sflag, size = 0x8, scoped, tag = 'scratch operand']
  #allocation6 [shape = 's32[]', space=sflag, size = 0x4, offset = 0, fixed_abs, tag = 'sflag constant byte address 0x0 - dummy sync flag']
  #allocation7 [shape = 's32[]', space=sflag, size = 0x4, offset = 0, fixed_abs, tag = 'sflag constant byte address 0x0 - dummy sync flag']
  %s0 = inlined_call_operand.vmem [shape: bf16[2,16,522], index: 0, kind: input, shape index: {}]
  %s1 = inlined_call_operand.vmem [shape: bf16[2,16,80], index: 1, kind: input, shape index: {}]
  %s2 = inlined_call_operand.vmem [shape: f32[16,1], index: 2, kind: input, shape index: {}]
  %s3 = inlined_call_operand.vmem [shape: f32[2,16,384], index: 3, kind: output, shape index: {}]
  %s4 = sld [smem:[#allocation0]]
  $region123: #{meta_conv2d.1} parent=0
    _
  %s6 = ssub.s32 1, %s4
  %s7 = scalar_select 0, %s6, %s4
  loop: start=0, step=1, limit=4
  $region2: #{meta_conv2d.1} parent=0 // loop_pre_header
    _
  $region3: #{meta_conv2d.1} parent=0 // loop_header
    %s9 = sphi 0, %s13
    %p10 = scmp.ge.s32.totalorder %s9, 4
    %s16 = sphi 0, %s35
    %s17 = sphi 0, %s31
    %s18 = sphi 0, %s27
    %s19 = sphi 0, %s16
    %s20 = sphi 0, %s17
    %s21 = sphi 0, %s18
    %s22 = sphi 0, %s19
    %s23 = sphi 0, %s20
    %s24 = sphi 0, %s21
    %s36 = sphi 0, %s36
    %s38 = sphi 0, %s36
    %s39 = sphi 0, %s38
    %s53 = sphi 0, %s39
    %s57 = sphi 0, %s57
    %s59 = sphi 0, %s57
    %s60 = sphi 0, %s59
    %s74 = sphi 0, %s60
    %s84 = sphi 0, %s86
    %s87 = sphi 0, %s84
    %s88 = sphi 0, %s87
    %s104 = sphi 0, %s88
  $region4: #{meta_conv2d.1} parent=0 // loop_header_branch
    %12 = sbr.rel (%p10) target = $region8
  $region5: #{meta_conv2d.1} parent=0 // loop_body
    %s14 = ssub.s32 %s9, 1
    %s15 = ssub.s32 %s9, 2
    %s25 = sadd.s32 1, %s18
    %p26 = scmp.ge.s32.totalorder %s25, 1
    %s27 = scalar_select %p26, 0, %s25
    %s28 = sadd.s32 1, %s17
    %s29 = scalar_select %p26, %s28, %s17
    %p30 = scmp.ge.s32.totalorder %s29, 1
    %s31 = scalar_select %p30, 0, %s29
    %s32 = sadd.s32 1, %s16
    %s33 = scalar_select %p30, %s32, %s16
    %p34 = scmp.ge.s32.totalorder %s33, 2
    %s35 = scalar_select %p34, 0, %s33
    %s37 = sadd.s32 %s36, 1
    %p40 = scmp.eq.s32.totalorder %s9, 1
    %p41 = scmp.ne.s32.totalorder %s36, %s38
    %p42 = scmp.eq.s32.totalorder %s9, 0
    %p43 = por %p41, %p42
    %p44 = scmp.ne.s32.totalorder %s36, %s38
    %p45 = scmp.eq.s32.totalorder %s14, 1
    %p46 = por %p44, %p45
    %p47 = scmp.ne.s32.totalorder %s38, %s39
    %p48 = scmp.eq.s32.totalorder %s14, 0
    %p49 = por %p47, %p48
    %p50 = scmp.ne.s32.totalorder %s38, %s39
    %p51 = scmp.eq.s32.totalorder %s15, 1
    %p52 = por %p50, %p51
    %p54 = scmp.ne.s32.totalorder %s39, %s53
    %p55 = scmp.eq.s32.totalorder %s15, 0
    %p56 = por %p54, %p55
    %s58 = sadd.s32 %s57, 1
    %p61 = scmp.eq.s32.totalorder %s9, 1
    %p62 = scmp.ne.s32.totalorder %s57, %s59
    %p63 = scmp.eq.s32.totalorder %s9, 0
    %p64 = por %p62, %p63
    %p65 = scmp.ne.s32.totalorder %s57, %s59
    %p66 = scmp.eq.s32.totalorder %s14, 1
    %p67 = por %p65, %p66
    %p68 = scmp.ne.s32.totalorder %s59, %s60
    %p69 = scmp.eq.s32.totalorder %s14, 0
    %p70 = por %p68, %p69
    %p71 = scmp.ne.s32.totalorder %s59, %s60
    %p72 = scmp.eq.s32.totalorder %s15, 1
    %p73 = por %p71, %p72
    %p75 = scmp.ne.s32.totalorder %s60, %s74
    %p76 = scmp.eq.s32.totalorder %s15, 0
    %p77 = por %p75, %p76
    %s78 = sadd.s32 %s17, %s18
    %s79 = sadd.s32 %s31, %s27
    %s80 = ssub.s32 %s16, %s35
    %s81 = ssub.s32 %s78, %s79
    %s82 = sor.u32 %s80, %s81
    %p83 = scmp.eq.s32.totalorder %s82, 0
    %s85 = sadd.s32 %s84, 1
    %s86 = scalar_select %p83, %s84, %s85
    %p89 = pneg %p83
    %p90 = scmp.eq.s32.totalorder %s9, 1
    %p91 = por %p89, %p90
    %p92 = scmp.ne.s32.totalorder %s84, %s87
    %p93 = scmp.eq.s32.totalorder %s9, 0
    %p94 = por %p92, %p93
    %p95 = scmp.ne.s32.totalorder %s84, %s87
    %p96 = scmp.eq.s32.totalorder %s14, 1
    %p97 = por %p95, %p96
    %p98 = scmp.ne.s32.totalorder %s87, %s88
    %p99 = scmp.eq.s32.totalorder %s14, 0
    %p100 = por %p98, %p99
    %p101 = scmp.ne.s32.totalorder %s87, %s88
    %p102 = scmp.eq.s32.totalorder %s15, 1
    %p103 = por %p101, %p102
    %p105 = scmp.ne.s32.totalorder %s88, %s104
    %p106 = scmp.eq.s32.totalorder %s15, 0
    %p107 = por %p105, %p106
    %p108 = scmp.le.s32.totalorder 1, %s9
    %p109 = scmp.lt.s32.totalorder %s9, 3
    %p110 = pnand %p108, %p109
    %p111 = pneg %p110
    // Predicated region
    $region9: #{meta_conv2d.1} parent=5 // pred_check
      _
    $region10: #{meta_conv2d.1} parent=5 // pred_check_branch
      %113 = sbr.rel (%p110) target = $region12
    $region11: #{meta_conv2d.1} parent=5 // pred_region
      %s114 = ssub.s32 %s9, 1
      // Predicated region
      $region13: #{meta_conv2d.1} parent=11 // pred_check
        %p115 = pneg %p49
      $region14: #{meta_conv2d.1} parent=11 // pred_check_branch
        %117 = sbr.rel (%p115) target = $region16
      $region15: #{meta_conv2d.1} parent=11 // pred_region
        _
      $region16: #{meta_conv2d.1} parent=11 // pred_fallthru
        _
      // Predicated region
      $region17: #{meta_conv2d.1} parent=11 // pred_check
        %p118 = pneg %p70
      $region18: #{meta_conv2d.1} parent=11 // pred_check_branch
        %120 = sbr.rel (%p118) target = $region20
      $region19: #{meta_conv2d.1} parent=11 // pred_region
        _
      $region20: #{meta_conv2d.1} parent=11 // pred_fallthru
        _
    $region12: #{meta_conv2d.1} parent=5 // pred_fallthru
      _
    %p121 = scmp.lt.s32.totalorder %s9, 2
    // Predicated region
    $region21: #{meta_conv2d.1} parent=5 // pred_check
      %p122 = pneg %p121
    $region22: #{meta_conv2d.1} parent=5 // pred_check_branch
      %124 = sbr.rel (%p122) target = $region24
    $region23: #{meta_conv2d.1} parent=5 // pred_region
      _
    $region24: #{meta_conv2d.1} parent=5 // pred_fallthru
      _
    %p125 = scmp.le.s32.totalorder 1, %s9
    %p126 = scmp.lt.s32.totalorder %s9, 3
    %p127 = pnand %p125, %p126
    %p128 = pneg %p127
    // Predicated region
    $region25: #{meta_conv2d.1} parent=5 // pred_check
      _
    $region26: #{meta_conv2d.1} parent=5 // pred_check_branch
      %130 = sbr.rel (%p127) target = $region28
    $region27: #{meta_conv2d.1} parent=5 // pred_region
      %s131 = ssub.s32 %s9, 1
      %p132 = pneg %p49
      %p133 = pneg %p46
      %p134 = pneg %p70
      %p135 = pneg %p67
      %p136 = pneg %p100
      %p137 = pneg %p97
      %s138 = sadd.s32 %s20, %s21
      %s139 = smul.u32 3, %s138
      %p140 = scmp.lt.s32.totalorder %s19, 1
      %s141 = scalar_select %p140, %s19, 1
      %p142 = scmp.lt.s32.totalorder %s139, 2
      %s143 = scalar_select %p142, %s139, 2
      %s144 = smul.addr %s141, 6
      %s145 = sadd.s32 %s143, %s144
      %s146 = smul.addr %s145, 8
      %s147 = scalar_lea.vmem %s3, %s146
      %s148 = sadd.s32 %s20, %s21
      %s149 = smul.u32 3, %s148
      %p150 = scmp.lt.s32.totalorder %s19, 1
      %s151 = scalar_select %p150, %s19, 1
      %p152 = scmp.lt.s32.totalorder %s149, 2
      %s153 = scalar_select %p152, %s149, 2
      %s154 = smul.addr %s151, 6
      %s155 = sadd.s32 %s153, %s154
      %s156 = smul.addr %s155, 8
      %s157 = scalar_lea.vmem %s3, %s156
      %s158 = sadd.s32 %s20, %s21
      %s159 = smul.u32 3, %s158
      %p161 = scmp.lt.s32.totalorder %s21, 0
      %s162 = ssub.s32 0, %s21
      %s163 = scalar_select %p161, %s162, %s21
      %s164 = sand.u32 %s163, 1
      %s165 = ssub.s32 0, %s164
      %s166 = scalar_select %p161, %s165, %s164
      %p167 = scmp.ne.s32.totalorder %s166, 0
      %p168 = scmp.lt.s32.totalorder %s166, 0
      %p169 = pnand %p168, %p167
      %p170 = pneg %p169
      %s171 = sadd.s32 %s166, 2
      %s172 = scalar_select %p170, %s171, %s166
      %p173 = scmp.eq.s32.totalorder %s21, 0
      // Predicated region
      $region29: #{meta_conv2d.1} parent=27 // pred_check
        %p174 = pneg %p173
      $region30: #{meta_conv2d.1} parent=27 // pred_check_branch
        %176 = sbr.rel (%p174) target = $region32
      $region31: #{meta_conv2d.1} parent=27 // pred_region
        %s177 = sadd.s32 %s20, %s21
        %s178 = smul.u32 %s177, 384
        %s179 = sshra.s32 %s178, 7
        %s180 = sand.u32 %s178, 127
        %s181 = smul.u32 %s19, 10
        %s182 = sadd.s32 %s179, %s181
        %s183 = smul.addr %s182, 4
        %s184 = scalar_lea.vmem %s0, %s183
        %s185 = smul.u32 %s172, 4
        %s186 = smul.addr %s185, 8
        %s187 = scalar_lea.vmem [#allocation2], %s186
        %s188 = scalar_lea.sflag [#allocation5], %s172
        %p190 = scmp.lt.u32.totalorder 4, 8
        %p191 = pneg %p190
        // Predicated region
        $region33: #{meta_conv2d.1} parent=31 // pred_check
          _
        $region34: #{meta_conv2d.1} parent=31 // pred_check_branch
          %193 = sbr.rel (%p190) target = $region36
        $region35: #{meta_conv2d.1} parent=31 // pred_region
          %s222 = sand.u32 4, 7
          %p223 = scmp.eq.s32.totalorder %s222, 0
          %p224 = pneg %p223
          // Predicated region
          $region48: #{meta_conv2d.1} parent=35 // pred_check
            _
          $region49: #{meta_conv2d.1} parent=35 // pred_check_branch
            %226 = sbr.rel (%p223) target = $region51
          $region50: #{meta_conv2d.1} parent=35 // pred_region
            %s227 = sand.u32 4, 7
            %s228 = ssub.s32 4, %s227
            %s229 = scalar_lea.vmem %s184, %s228
            %s230 = ssub.s32 4, %s227
            %s231 = scalar_lea.vmem %s187, %s230 [#allocation2]
            loop: start=0, step=1, limit=1
            $region52: #{meta_conv2d.1} parent=50 // loop_pre_header
              _
            $region53: #{meta_conv2d.1} parent=50 // loop_header
              %s233 = sphi 0, %s237
              %p234 = scmp.ge.s32.totalorder %s233, 1
              %s238 = sphi %s184, %s184
              %s239 = sphi %s187, %s187
            $region54: #{meta_conv2d.1} parent=50 // loop_header_branch
              %236 = sbr.rel (%p234) target = $region58
            $region55: #{meta_conv2d.1} parent=50 // loop_body
              _
            $region56: #{meta_conv2d.1} parent=50 // loop_footer
              %s237 = sadd.s32 1, %s233
            $region57: #{meta_conv2d.1} parent=50 // loop_footer_branch
              %232 = sbr.rel target = $region53
            $region58: #{meta_conv2d.1} parent=50 // loop_exit
              _
            %s240 = sshllo.u32 0, %s227
            loop: start=0, step=1, limit=1
            $region59: #{meta_conv2d.1} parent=50 // loop_pre_header
              _
            $region60: #{meta_conv2d.1} parent=50 // loop_header
              %s242 = sphi 0, %s246
              %p243 = scmp.ge.s32.totalorder %s242, 1
              %s247 = sphi %s229, %s229
              %s248 = sphi %s231, %s231
            $region61: #{meta_conv2d.1} parent=50 // loop_header_branch
              %245 = sbr.rel (%p243) target = $region65
            $region62: #{meta_conv2d.1} parent=50 // loop_body
              %v249 = vld [vmem:[%s247] sm:%s240]
              %250 = vst [vmem:[%s248] sm:%s240] %v249
              %v251 = vld [vmem:[%s247 + $0x14] sm:%s240]
              %252 = vst [vmem:[%s248 + $0x4] sm:%s240] %v251
              %v253 = vld [vmem:[%s247 + $0x4] sm:%s240]
              %254 = vst [vmem:[%s248 + $0x8] sm:%s240] %v253
              %v255 = vld [vmem:[%s247 + $0x18] sm:%s240]
              %256 = vst [vmem:[%s248 + $0xc] sm:%s240] %v255
              %v257 = vld [vmem:[%s247 + $0x8] sm:%s240]
              %258 = vst [vmem:[%s248 + $0x10] sm:%s240] %v257
              %v259 = vld [vmem:[%s247 + $0x1c] sm:%s240]
              %260 = vst [vmem:[%s248 + $0x14] sm:%s240] %v259
              %v261 = vld [vmem:[%s247 + $0xc] sm:%s240]
              %262 = vst [vmem:[%s248 + $0x18] sm:%s240] %v261
              %v263 = vld [vmem:[%s247 + $0x20] sm:%s240]
              %264 = vst [vmem:[%s248 + $0x1c] sm:%s240] %v263
            $region63: #{meta_conv2d.1} parent=50 // loop_footer
              %s246 = sadd.s32 1, %s242
            $region64: #{meta_conv2d.1} parent=50 // loop_footer_branch
              %241 = sbr.rel target = $region60
            $region65: #{meta_conv2d.1} parent=50 // loop_exit
              _
          $region51: #{meta_conv2d.1} parent=35 // pred_fallthru
            _
        $region36: #{meta_conv2d.1} parent=31 // pred_fallthru
          _
        // Predicated region
        $region37: #{meta_conv2d.1} parent=31 // pred_check
          %p194 = pneg %p190
        $region38: #{meta_conv2d.1} parent=31 // pred_check_branch
          %196 = sbr.rel (%p194) target = $region40
        $region39: #{meta_conv2d.1} parent=31 // pred_region
          %s197 = sshllo.u32 0, 4
          loop: start=0, step=1, limit=1
          $region41: #{meta_conv2d.1} parent=39 // loop_pre_header
            _
          $region42: #{meta_conv2d.1} parent=39 // loop_header
            %s199 = sphi 0, %s203
            %p200 = scmp.ge.s32.totalorder %s199, 1
            %s204 = sphi %s184, %s184
            %s205 = sphi %s187, %s187
          $region43: #{meta_conv2d.1} parent=39 // loop_header_branch
            %202 = sbr.rel (%p200) target = $region47
          $region44: #{meta_conv2d.1} parent=39 // loop_body
            %v206 = vld [vmem:[%s204] sm:%s197]
            %207 = vst [vmem:[%s205] sm:%s197] %v206
            %v208 = vld [vmem:[%s204 + $0x14] sm:%s197]
            %209 = vst [vmem:[%s205 + $0x4] sm:%s197] %v208
            %v210 = vld [vmem:[%s204 + $0x4] sm:%s197]
            %211 = vst [vmem:[%s205 + $0x8] sm:%s197] %v210
            %v212 = vld [vmem:[%s204 + $0x18] sm:%s197]
            %213 = vst [vmem:[%s205 + $0xc] sm:%s197] %v212
            %v214 = vld [vmem:[%s204 + $0x8] sm:%s197]
            %215 = vst [vmem:[%s205 + $0x10] sm:%s197] %v214
            %v216 = vld [vmem:[%s204 + $0x1c] sm:%s197]
            %217 = vst [vmem:[%s205 + $0x14] sm:%s197] %v216
            %v218 = vld [vmem:[%s204 + $0xc] sm:%s197]
            %219 = vst [vmem:[%s205 + $0x18] sm:%s197] %v218
            %v220 = vld [vmem:[%s204 + $0x20] sm:%s197]
            %221 = vst [vmem:[%s205 + $0x1c] sm:%s197] %v220
          $region45: #{meta_conv2d.1} parent=39 // loop_footer
            %s203 = sadd.s32 1, %s199
          $region46: #{meta_conv2d.1} parent=39 // loop_footer_branch
            %198 = sbr.rel target = $region42
          $region47: #{meta_conv2d.1} parent=39 // loop_exit
            _
        $region40: #{meta_conv2d.1} parent=31 // pred_fallthru
          _
        // Predicated region
        $region66: #{meta_conv2d.1} parent=31 // pred_check
          _
        $region67: #{meta_conv2d.1} parent=31 // pred_check_branch
          %267 = sbr.rel (0) target = $region69
        $region68: #{meta_conv2d.1} parent=31 // pred_region
          %268 = vsyncadd %s188, 512
        $region69: #{meta_conv2d.1} parent=31 // pred_fallthru
          _
      $region32: #{meta_conv2d.1} parent=27 // pred_fallthru
        _
      %s269 = sadd.s32 %s20, %s21
      %s270 = smul.u32 %s269, 384
      %s271 = smul.u32 %s172, 4
      %s272 = smul.addr %s271, 8
      %s273 = scalar_lea.vmem [#allocation2], %s272
      %s274 = scalar_lea.sflag [#allocation5], %s172
      %s275 = smul.u32 4, 2
      %s276 = smul.u32 %s275, 4
      %s277 = sshll.u32 %s276, 4
      %278 = dma.done %s274, %s277
      %s279 = sadd.s32 %s21, 1
      %p280 = scmp.lt.s32.totalorder %s279, 1
      // Predicated region
      $region70: #{meta_conv2d.1} parent=27 // pred_check
        %p281 = pneg %p280
      $region71: #{meta_conv2d.1} parent=27 // pred_check_branch
        %283 = sbr.rel (%p281) target = $region73
      $region72: #{meta_conv2d.1} parent=27 // pred_region
        %s284 = ssub.s32 1, %s172
        %s285 = sadd.s32 %s20, %s279
        %s286 = smul.u32 %s285, 384
        %s287 = sshra.s32 %s286, 7
        %s288 = sand.u32 %s286, 127
        %s289 = smul.u32 %s19, 10
        %s290 = sadd.s32 %s287, %s289
        %s291 = smul.addr %s290, 4
        %s292 = scalar_lea.vmem %s0, %s291
        %s293 = smul.u32 %s284, 4
        %s294 = smul.addr %s293, 8
        %s295 = scalar_lea.vmem [#allocation2], %s294
        %s296 = scalar_lea.sflag [#allocation5], %s284
        %p298 = scmp.lt.u32.totalorder 4, 8
        %p299 = pneg %p298
        // Predicated region
        $region74: #{meta_conv2d.1} parent=72 // pred_check
          _
        $region75: #{meta_conv2d.1} parent=72 // pred_check_branch
          %301 = sbr.rel (%p298) target = $region77
        $region76: #{meta_conv2d.1} parent=72 // pred_region
          %s330 = sand.u32 4, 7
          %p331 = scmp.eq.s32.totalorder %s330, 0
          %p332 = pneg %p331
          // Predicated region
          $region89: #{meta_conv2d.1} parent=76 // pred_check
            _
          $region90: #{meta_conv2d.1} parent=76 // pred_check_branch
            %334 = sbr.rel (%p331) target = $region92
          $region91: #{meta_conv2d.1} parent=76 // pred_region
            %s335 = sand.u32 4, 7
            %s336 = ssub.s32 4, %s335
            %s337 = scalar_lea.vmem %s292, %s336
            %s338 = ssub.s32 4, %s335
            %s339 = scalar_lea.vmem %s295, %s338 [#allocation2]
            loop: start=0, step=1, limit=1
            $region93: #{meta_conv2d.1} parent=91 // loop_pre_header
              _
            $region94: #{meta_conv2d.1} parent=91 // loop_header
              %s341 = sphi 0, %s345
              %p342 = scmp.ge.s32.totalorder %s341, 1
              %s346 = sphi %s292, %s292
              %s347 = sphi %s295, %s295
            $region95: #{meta_conv2d.1} parent=91 // loop_header_branch
              %344 = sbr.rel (%p342) target = $region99
            $region96: #{meta_conv2d.1} parent=91 // loop_body
              _
            $region97: #{meta_conv2d.1} parent=91 // loop_footer
              %s345 = sadd.s32 1, %s341
            $region98: #{meta_conv2d.1} parent=91 // loop_footer_branch
              %340 = sbr.rel target = $region94
            $region99: #{meta_conv2d.1} parent=91 // loop_exit
              _
            %s348 = sshllo.u32 0, %s335
            loop: start=0, step=1, limit=1
            $region100: #{meta_conv2d.1} parent=91 // loop_pre_header
              _
            $region101: #{meta_conv2d.1} parent=91 // loop_header
              %s350 = sphi 0, %s354
              %p351 = scmp.ge.s32.totalorder %s350, 1
              %s355 = sphi %s337, %s337
              %s356 = sphi %s339, %s339
            $region102: #{meta_conv2d.1} parent=91 // loop_header_branch
              %353 = sbr.rel (%p351) target = $region106
            $region103: #{meta_conv2d.1} parent=91 // loop_body
              %v357 = vld [vmem:[%s355] sm:%s348]
              %358 = vst [vmem:[%s356] sm:%s348] %v357
              %v359 = vld [vmem:[%s355 + $0x14] sm:%s348]
              %360 = vst [vmem:[%s356 + $0x4] sm:%s348] %v359
              %v361 = vld [vmem:[%s355 + $0x4] sm:%s348]
              %362 = vst [vmem:[%s356 + $0x8] sm:%s348] %v361
              %v363 = vld [vmem:[%s355 + $0x18] sm:%s348]
              %364 = vst [vmem:[%s356 + $0xc] sm:%s348] %v363
              %v365 = vld [vmem:[%s355 + $0x8] sm:%s348]
              %366 = vst [vmem:[%s356 + $0x10] sm:%s348] %v365
              %v367 = vld [vmem:[%s355 + $0x1c] sm:%s348]
              %368 = vst [vmem:[%s356 + $0x14] sm:%s348] %v367
              %v369 = vld [vmem:[%s355 + $0xc] sm:%s348]
              %370 = vst [vmem:[%s356 + $0x18] sm:%s348] %v369
              %v371 = vld [vmem:[%s355 + $0x20] sm:%s348]
              %372 = vst [vmem:[%s356 + $0x1c] sm:%s348] %v371
            $region104: #{meta_conv2d.1} parent=91 // loop_footer
              %s354 = sadd.s32 1, %s350
            $region105: #{meta_conv2d.1} parent=91 // loop_footer_branch
              %349 = sbr.rel target = $region101
            $region106: #{meta_conv2d.1} parent=91 // loop_exit
              _
          $region92: #{meta_conv2d.1} parent=76 // pred_fallthru
            _
        $region77: #{meta_conv2d.1} parent=72 // pred_fallthru
          _
        // Predicated region
        $region78: #{meta_conv2d.1} parent=72 // pred_check
          %p302 = pneg %p298
        $region79: #{meta_conv2d.1} parent=72 // pred_check_branch
          %304 = sbr.rel (%p302) target = $region81
        $region80: #{meta_conv2d.1} parent=72 // pred_region
          %s305 = sshllo.u32 0, 4
          loop: start=0, step=1, limit=1
          $region82: #{meta_conv2d.1} parent=80 // loop_pre_header
            _
          $region83: #{meta_conv2d.1} parent=80 // loop_header
            %s307 = sphi 0, %s311
            %p308 = scmp.ge.s32.totalorder %s307, 1
            %s312 = sphi %s292, %s292
            %s313 = sphi %s295, %s295
          $region84: #{meta_conv2d.1} parent=80 // loop_header_branch
            %310 = sbr.rel (%p308) target = $region88
          $region85: #{meta_conv2d.1} parent=80 // loop_body
            %v314 = vld [vmem:[%s312] sm:%s305]
            %315 = vst [vmem:[%s313] sm:%s305] %v314
            %v316 = vld [vmem:[%s312 + $0x14] sm:%s305]
            %317 = vst [vmem:[%s313 + $0x4] sm:%s305] %v316
            %v318 = vld [vmem:[%s312 + $0x4] sm:%s305]
            %319 = vst [vmem:[%s313 + $0x8] sm:%s305] %v318
            %v320 = vld [vmem:[%s312 + $0x18] sm:%s305]
            %321 = vst [vmem:[%s313 + $0xc] sm:%s305] %v320
            %v322 = vld [vmem:[%s312 + $0x8] sm:%s305]
            %323 = vst [vmem:[%s313 + $0x10] sm:%s305] %v322
            %v324 = vld [vmem:[%s312 + $0x1c] sm:%s305]
            %325 = vst [vmem:[%s313 + $0x14] sm:%s305] %v324
            %v326 = vld [vmem:[%s312 + $0xc] sm:%s305]
            %327 = vst [vmem:[%s313 + $0x18] sm:%s305] %v326
            %v328 = vld [vmem:[%s312 + $0x20] sm:%s305]
            %329 = vst [vmem:[%s313 + $0x1c] sm:%s305] %v328
          $region86: #{meta_conv2d.1} parent=80 // loop_footer
            %s311 = sadd.s32 1, %s307
          $region87: #{meta_conv2d.1} parent=80 // loop_footer_branch
            %306 = sbr.rel target = $region83
          $region88: #{meta_conv2d.1} parent=80 // loop_exit
            _
        $region81: #{meta_conv2d.1} parent=72 // pred_fallthru
          _
        // Predicated region
        $region107: #{meta_conv2d.1} parent=72 // pred_check
          _
        $region108: #{meta_conv2d.1} parent=72 // pred_check_branch
          %375 = sbr.rel (0) target = $region110
        $region109: #{meta_conv2d.1} parent=72 // pred_region
          %376 = vsyncadd %s296, 512
        $region110: #{meta_conv2d.1} parent=72 // pred_fallthru
          _
      $region73: #{meta_conv2d.1} parent=27 // pred_fallthru
        _
      %v377 = vld [vmem:[%s273] sm:$0xff]
      %v378 = vld [vmem:[%s273 + $0x8] sm:$0xff]
      %v379 = vld [vmem:[%s273 + $0x10] sm:$0xff]
      %380 = vst [vmem:[#allocation3] sm:$0xff] %v377
      %381 = vst [vmem:[#allocation3 + $0x8] sm:$0xff] %v378
      %382 = vst [vmem:[#allocation3 + $0x10] sm:$0xff] %v379
      %v383 = vld [vmem:[%s273] sm:$0xff]
      %v384 = vld [vmem:[%s273 + $0x8] sm:$0xff]
      %v385 = vld [vmem:[%s273 + $0x10] sm:$0xff]
      %v386 = vld [vmem:[%s273 + $0x18] sm:$0xff]
      %391 = vrot.lane.b32.xlu0 %v383, 127
      %v392 = vpop.permute.xlu0 %391
      %393 = vrot.lane.b32.xlu0 %v384, 127
      %v394 = vpop.permute.xlu0 %393
      %395 = vrot.lane.b32.xlu0 %v385, 127
      %v396 = vpop.permute.xlu0 %395
      %397 = vrot.lane.b32.xlu0 %v386, 127
      %v398 = vpop.permute.xlu0 %397
      %vm399 = vcmask 1039360
      %v400 = vsel %vm399, %v392, %v394
      %v401 = vsel %vm399, %v394, %v396
      %v402 = vsel %vm399, %v396, %v398
      %406 = vst [vmem:[#allocation3 + $0x18] sm:$0xff] %v400
      %407 = vst [vmem:[#allocation3 + $0x20] sm:$0xff] %v401
      %408 = vst [vmem:[#allocation3 + $0x28] sm:$0xff] %v402
      %v409 = vld [vmem:[%s273] sm:$0xff]
      %v410 = vld [vmem:[%s273 + $0x8] sm:$0xff]
      %v411 = vld [vmem:[%s273 + $0x10] sm:$0xff]
      %v412 = vld [vmem:[%s273 + $0x18] sm:$0xff]
      %417 = vrot.lane.b32.xlu0 %v409, 126
      %v418 = vpop.permute.xlu0 %417
      %419 = vrot.lane.b32.xlu0 %v410, 126
      %v420 = vpop.permute.xlu0 %419
      %421 = vrot.lane.b32.xlu0 %v411, 126
      %v422 = vpop.permute.xlu0 %421
      %423 = vrot.lane.b32.xlu0 %v412, 126
      %v424 = vpop.permute.xlu0 %423
      %vm425 = vcmask 1031168
      %v426 = vsel %vm425, %v418, %v420
      %v427 = vsel %vm425, %v420, %v422
      %v428 = vsel %vm425, %v422, %v424
      %432 = vst [vmem:[#allocation3 + $0x30] sm:$0xff] %v426
      %433 = vst [vmem:[#allocation3 + $0x38] sm:$0xff] %v427
      %434 = vst [vmem:[#allocation3 + $0x40] sm:$0xff] %v428
      %v435 = vld [vmem:[%s273] sm:$0xff]
      %v436 = vld [vmem:[%s273 + $0x8] sm:$0xff]
      %v437 = vld [vmem:[%s273 + $0x10] sm:$0xff]
      %v438 = vld [vmem:[%s273 + $0x18] sm:$0xff]
      %443 = vrot.lane.b32.xlu0 %v435, 110
      %v444 = vpop.permute.xlu0 %443
      %445 = vrot.lane.b32.xlu0 %v436, 110
      %v446 = vpop.permute.xlu0 %445
      %447 = vrot.lane.b32.xlu0 %v437, 110
      %v448 = vpop.permute.xlu0 %447
      %449 = vrot.lane.b32.xlu0 %v438, 110
      %v450 = vpop.permute.xlu0 %449
      %vm451 = vcmask 900096
      %v452 = vsel %vm451, %v444, %v446
      %v453 = vsel %vm451, %v446, %v448
      %v454 = vsel %vm451, %v448, %v450
      %458 = vst [vmem:[#allocation3 + $0x48] sm:$0xff] %v452
      %459 = vst [vmem:[#allocation3 + $0x50] sm:$0xff] %v453
      %460 = vst [vmem:[#allocation3 + $0x58] sm:$0xff] %v454
      %v461 = vld [vmem:[%s273] sm:$0xff]
      %v462 = vld [vmem:[%s273 + $0x8] sm:$0xff]
      %v463 = vld [vmem:[%s273 + $0x10] sm:$0xff]
      %v464 = vld [vmem:[%s273 + $0x18] sm:$0xff]
      %469 = vrot.lane.b32.xlu0 %v461, 109
      %v470 = vpop.permute.xlu0 %469
      %471 = vrot.lane.b32.xlu0 %v462, 109
      %v472 = vpop.permute.xlu0 %471
      %473 = vrot.lane.b32.xlu0 %v463, 109
      %v474 = vpop.permute.xlu0 %473
      %475 = vrot.lane.b32.xlu0 %v464, 109
      %v476 = vpop.permute.xlu0 %475
      %vm477 = vcmask 891904
      %v478 = vsel %vm477, %v470, %v472
      %v479 = vsel %vm477, %v472, %v474
      %v480 = vsel %vm477, %v474, %v476
      %484 = vst [vmem:[#allocation3 + $0x60] sm:$0xff] %v478
      %485 = vst [vmem:[#allocation3 + $0x68] sm:$0xff] %v479
      %486 = vst [vmem:[#allocation3 + $0x70] sm:$0xff] %v480
      %v487 = vld [vmem:[#allocation3] sm:$0xff]
      %v488 = vld [vmem:[#allocation3 + $0x8] sm:$0xff]
      %v489 = vld [vmem:[#allocation3 + $0x10] sm:$0xff]
      %v490 = vld [vmem:[#allocation3 + $0x18] sm:$0xff]
      %v491 = vld [vmem:[#allocation3 + $0x20] sm:$0xff]
      %v492 = vld [vmem:[#allocation3 + $0x28] sm:$0xff]
      %v493 = vld [vmem:[#allocation3 + $0x30] sm:$0xff]
      %v494 = vld [vmem:[#allocation3 + $0x38] sm:$0xff]
      %v495 = vld [vmem:[#allocation3 + $0x40] sm:$0xff]
      %v496 = vld [vmem:[#allocation3 + $0x48] sm:$0xff]
      %v497 = vld [vmem:[#allocation3 + $0x50] sm:$0xff]
      %v498 = vld [vmem:[#allocation3 + $0x58] sm:$0xff]
      %v499 = vld [vmem:[#allocation3 + $0x60] sm:$0xff]
      %v500 = vld [vmem:[#allocation3 + $0x68] sm:$0xff]
      %v501 = vld [vmem:[#allocation3 + $0x70] sm:$0xff]
      %v502 = vld [vmem:[%s1] sm:$0xf]
      %v503 = vld [vmem:[%s1 + $0x4] sm:$0xf]
      %v506 = vunpack.c.l.b16 %v502
      %v507 = vunpack.c.l.b16 %v503
      %v508 = vpack.c.b16 %v507, %v506
      %vm509 = vcmask 654336
      %v511 = vsel %vm509, %v508, 0
      %513 = vmatprep.subr.bf16.mxu0 %v488
      %514 = vmatpush1.bf16.msra.mxu0 %v487
      %515 = vmatprep.subr.bf16.mxu0 %v491
      %516 = vmatpush1.bf16.msra.mxu0 %v490
      %517 = vmatprep.subr.bf16.mxu0 %v494
      %518 = vmatpush1.bf16.msra.mxu0 %v493
      %519 = vmatprep.subr.bf16.mxu0 %v497
      %520 = vmatpush1.bf16.msra.mxu0 %v496
      %521 = vmatprep.subr.bf16.mxu0 %v500
      %522 = vmatpush1.bf16.msra.mxu0 %v499
      %523 = vmatprep.subr.bf16.mxu0 0
      %524 = vmatpush1.bf16.msra.mxu0 0
      %525 = vmatprep.subr.bf16.mxu0 0
      %526 = vmatpush1.bf16.msra.mxu0 0
      %527 = vmatprep.subr.bf16.mxu0 0
      %528 = vmatpush1.bf16.msra.mxu0 0
      %529 = vmatprep.subr.bf16.mxu0 0
      %530 = vmatpush1.bf16.msra.mxu0 0
      %531 = vmatprep.subr.bf16.mxu0 0
      %532 = vmatpush1.bf16.msra.mxu0 0
      %533 = vmatprep.subr.bf16.mxu0 0
      %534 = vmatpush1.bf16.msra.mxu0 0
      %535 = vmatprep.subr.bf16.mxu0 0
      %536 = vmatpush1.bf16.msra.mxu0 0
      %537 = vmatprep.subr.bf16.mxu0 0
      %538 = vmatpush1.bf16.msra.mxu0 0
      %539 = vmatprep.subr.bf16.mxu0 0
      %540 = vmatpush1.bf16.msra.mxu0 0
      %541 = vmatprep.subr.bf16.mxu0 0
      %542 = vmatpush1.bf16.msra.mxu0 0
      %543 = vmatprep.subr.bf16.mxu0 0
      %544 = vmatpush1.bf16.msra.mxu0 0
      %545 = vmatprep.mubr.bf16.mxu0 0
      %546 = vmatmul.mubr.bf16.gmra.mrb[0].mxu0 %v511
      %v547 = vpop.f32.mrb[0].mxu0
      %v548 = vadd.f32 0.0, %v547
      %v549 = vpop.f32.mrb[0].mxu0
      %v550 = vadd.f32 0.0, %v549
      %v551 = vpop.f32.mrb[0].mxu0
      %v552 = vadd.f32 0.0, %v551
      %v553 = vpop.f32.mrb[0].mxu0
      %v554 = vadd.f32 0.0, %v553
      %555 = vdwg.mxu0
      %556 = vmatprep.subr.bf16.mxu0 0
      %557 = vmatpush1.bf16.msra.mxu0 %v489
      %558 = vmatprep.subr.bf16.mxu0 0
      %559 = vmatpush1.bf16.msra.mxu0 %v492
      %560 = vmatprep.subr.bf16.mxu0 0
      %561 = vmatpush1.bf16.msra.mxu0 %v495
      %562 = vmatprep.subr.bf16.mxu0 0
      %563 = vmatpush1.bf16.msra.mxu0 %v498
      %564 = vmatprep.subr.bf16.mxu0 0
      %565 = vmatpush1.bf16.msra.mxu0 %v501
      %566 = vmatprep.subr.bf16.mxu0 0
      %567 = vmatpush1.bf16.msra.mxu0 0
      %568 = vmatprep.subr.bf16.mxu0 0
      %569 = vmatpush1.bf16.msra.mxu0 0
      %570 = vmatprep.subr.bf16.mxu0 0
      %571 = vmatpush1.bf16.msra.mxu0 0
      %572 = vmatprep.subr.bf16.mxu0 0
      %573 = vmatpush1.bf16.msra.mxu0 0
      %574 = vmatprep.subr.bf16.mxu0 0
      %575 = vmatpush1.bf16.msra.mxu0 0
      %576 = vmatprep.subr.bf16.mxu0 0
      %577 = vmatpush1.bf16.msra.mxu0 0
      %578 = vmatprep.subr.bf16.mxu0 0
      %579 = vmatpush1.bf16.msra.mxu0 0
      %580 = vmatprep.subr.bf16.mxu0 0
      %581 = vmatpush1.bf16.msra.mxu0 0
      %582 = vmatprep.subr.bf16.mxu0 0
      %583 = vmatpush1.bf16.msra.mxu0 0
      %584 = vmatprep.subr.bf16.mxu0 0
      %585 = vmatpush1.bf16.msra.mxu0 0
      %586 = vmatprep.subr.bf16.mxu0 0
      %587 = vmatpush1.bf16.msra.mxu0 0
      %588 = vmatprep.mubr.bf16.mxu0 0
      %589 = vmatmul.mubr.bf16.gmra.mrb[0].mxu0 %v511
      %v590 = vpop.f32.mrb[0].mxu0
      %v591 = vadd.f32 0.0, %v590
      %v592 = vpop.f32.mrb[0].mxu0
      %v593 = vpop.f32.mrb[0].mxu0
      %v594 = vadd.f32 0.0, %v593
      %v595 = vpop.f32.mrb[0].mxu0
      %596 = vdwg.mxu0
      %597 = vst [vmem:[#allocation4] sm:$0xff] %v548
      %598 = vst [vmem:[#allocation4 + $0x8] sm:$0xff] %v550
      %599 = vst [vmem:[#allocation4 + $0x10] sm:$0xff] %v591
      %600 = vst [vmem:[#allocation4 + $0x18] sm:$0xff] %v552
      %601 = vst [vmem:[#allocation4 + $0x20] sm:$0xff] %v554
      %602 = vst [vmem:[#allocation4 + $0x28] sm:$0xff] %v594
      %v603 = vld [vmem:[%s273] sm:$0xff]
      %v604 = vld [vmem:[%s273 + $0x8] sm:$0xff]
      %v605 = vld [vmem:[%s273 + $0x10] sm:$0xff]
      %v606 = vld [vmem:[%s273 + $0x18] sm:$0xff]
      %611 = vrot.lane.b32.xlu0 %v603, 108
      %v612 = vpop.permute.xlu0 %611
      %613 = vrot.lane.b32.xlu0 %v604, 108
      %v614 = vpop.permute.xlu0 %613
      %615 = vrot.lane.b32.xlu0 %v605, 108
      %v616 = vpop.permute.xlu0 %615
      %617 = vrot.lane.b32.xlu0 %v606, 108
      %v618 = vpop.permute.xlu0 %617
      %vm619 = vcmask 883712
      %v620 = vsel %vm619, %v612, %v614
      %v621 = vsel %vm619, %v614, %v616
      %v622 = vsel %vm619, %v616, %v618
      %626 = vst [vmem:[#allocation3 + $0x78] sm:$0xff] %v620
      %627 = vst [vmem:[#allocation3 + $0x80] sm:$0xff] %v621
      %628 = vst [vmem:[#allocation3 + $0x88] sm:$0xff] %v622
      %v629 = vld [vmem:[%s273] sm:$0xff]
      %v630 = vld [vmem:[%s273 + $0x8] sm:$0xff]
      %v631 = vld [vmem:[%s273 + $0x10] sm:$0xff]
      %v632 = vld [vmem:[%s273 + $0x18] sm:$0xff]
      %637 = vrot.lane.b32.xlu0 %v629, 92
      %v638 = vpop.permute.xlu0 %637
      %639 = vrot.lane.b32.xlu0 %v630, 92
      %v640 = vpop.permute.xlu0 %639
      %641 = vrot.lane.b32.xlu0 %v631, 92
      %v642 = vpop.permute.xlu0 %641
      %643 = vrot.lane.b32.xlu0 %v632, 92
      %v644 = vpop.permute.xlu0 %643
      %vm645 = vcmask 752640
      %v646 = vsel %vm645, %v638, %v640
      %v647 = vsel %vm645, %v640, %v642
      %v648 = vsel %vm645, %v642, %v644
      %652 = vst [vmem:[#allocation3 + $0x90] sm:$0xff] %v646
      %653 = vst [vmem:[#allocation3 + $0x98] sm:$0xff] %v647
      %654 = vst [vmem:[#allocation3 + $0xa0] sm:$0xff] %v648
      %v655 = vld [vmem:[%s273] sm:$0xff]
      %v656 = vld [vmem:[%s273 + $0x8] sm:$0xff]
      %v657 = vld [vmem:[%s273 + $0x10] sm:$0xff]
      %v658 = vld [vmem:[%s273 + $0x18] sm:$0xff]
      %663 = vrot.lane.b32.xlu0 %v655, 91
      %v664 = vpop.permute.xlu0 %663
      %665 = vrot.lane.b32.xlu0 %v656, 91
      %v666 = vpop.permute.xlu0 %665
      %667 = vrot.lane.b32.xlu0 %v657, 91
      %v668 = vpop.permute.xlu0 %667
      %669 = vrot.lane.b32.xlu0 %v658, 91
      %v670 = vpop.permute.xlu0 %669
      %vm671 = vcmask 744448
      %v672 = vsel %vm671, %v664, %v666
      %v673 = vsel %vm671, %v666, %v668
      %v674 = vsel %vm671, %v668, %v670
      %678 = vst [vmem:[#allocation3 + $0xa8] sm:$0xff] %v672
      %679 = vst [vmem:[#allocation3 + $0xb0] sm:$0xff] %v673
      %680 = vst [vmem:[#allocation3 + $0xb8] sm:$0xff] %v674
      %v681 = vld [vmem:[%s273] sm:$0xff]
      %v682 = vld [vmem:[%s273 + $0x8] sm:$0xff]
      %v683 = vld [vmem:[%s273 + $0x10] sm:$0xff]
      %v684 = vld [vmem:[%s273 + $0x18] sm:$0xff]
      %689 = vrot.lane.b32.xlu0 %v681, 90
      %v690 = vpop.permute.xlu0 %689
      %691 = vrot.lane.b32.xlu0 %v682, 90
      %v692 = vpop.permute.xlu0 %691
      %693 = vrot.lane.b32.xlu0 %v683, 90
      %v694 = vpop.permute.xlu0 %693
      %695 = vrot.lane.b32.xlu0 %v684, 90
      %v696 = vpop.permute.xlu0 %695
      %vm697 = vcmask 736256
      %v698 = vsel %vm697, %v690, %v692
      %v699 = vsel %vm697, %v692, %v694
      %v700 = vsel %vm697, %v694, %v696
      %704 = vst [vmem:[#allocation3 + $0xc0] sm:$0xff] %v698
      %705 = vst [vmem:[#allocation3 + $0xc8] sm:$0xff] %v699
      %706 = vst [vmem:[#allocation3 + $0xd0] sm:$0xff] %v700
      %v707 = vld [vmem:[%s273] sm:$0xff]
      %v708 = vld [vmem:[%s273 + $0x8] sm:$0xff]
      %v709 = vld [vmem:[%s273 + $0x10] sm:$0xff]
      %v710 = vld [vmem:[%s273 + $0x18] sm:$0xff]
      %715 = vrot.lane.b32.xlu0 %v707, 90
      %v716 = vpop.permute.xlu0 %715
      %717 = vrot.lane.b32.xlu0 %v708, 90
      %v718 = vpop.permute.xlu0 %717
      %719 = vrot.lane.b32.xlu0 %v709, 90
      %v720 = vpop.permute.xlu0 %719
      %721 = vrot.lane.b32.xlu0 %v710, 90
      %v722 = vpop.permute.xlu0 %721
      %v723 = vsel %vm697, %v716, %v718
      %v724 = vsel %vm697, %v718, %v720
      %v725 = vsel %vm697, %v720, %v722
      %729 = vst [vmem:[#allocation3 + $0xd8] sm:$0xff] %v723
      %730 = vst [vmem:[#allocation3 + $0xe0] sm:$0xff] %v724
      %731 = vst [vmem:[#allocation3 + $0xe8] sm:$0xff] %v725
      %v732 = vld [vmem:[#allocation3 + $0x78] sm:$0xff]
      %v733 = vld [vmem:[#allocation3 + $0x80] sm:$0xff]
      %v734 = vld [vmem:[#allocation3 + $0x88] sm:$0xff]
      %v735 = vld [vmem:[#allocation3 + $0x90] sm:$0xff]
      %v736 = vld [vmem:[#allocation3 + $0x98] sm:$0xff]
      %v737 = vld [vmem:[#allocation3 + $0xa0] sm:$0xff]
      %v738 = vld [vmem:[#allocation3 + $0xa8] sm:$0xff]
      %v739 = vld [vmem:[#allocation3 + $0xb0] sm:$0xff]
      %v740 = vld [vmem:[#allocation3 + $0xb8] sm:$0xff]
      %v741 = vld [vmem:[#allocation3 + $0xc0] sm:$0xff]
      %v742 = vld [vmem:[#allocation3 + $0xc8] sm:$0xff]
      %v743 = vld [vmem:[#allocation3 + $0xd0] sm:$0xff]
      %v744 = vld [vmem:[#allocation3 + $0xd8] sm:$0xff]
      %v745 = vld [vmem:[#allocation3 + $0xe0] sm:$0xff]
      %v746 = vld [vmem:[#allocation3 + $0xe8] sm:$0xff]
      %s747 = scalar_lea.vmem %s1, 8
      %v748 = vld [vmem:[%s747] sm:$0xf]
      %v749 = vld [vmem:[%s747 + $0x4] sm:$0xf]
      %v752 = vunpack.c.l.b16 %v748
      %v753 = vunpack.c.l.b16 %v749
      %v754 = vpack.c.b16 %v753, %v752
      %v756 = vsel %vm509, %v754, 0
      %758 = vmatprep.subr.bf16.mxu0 %v733
      %759 = vmatpush1.bf16.msra.mxu0 %v732
      %760 = vmatprep.subr.bf16.mxu0 %v736
      %761 = vmatpush1.bf16.msra.mxu0 %v735
      %762 = vmatprep.subr.bf16.mxu0 %v739
      %763 = vmatpush1.bf16.msra.mxu0 %v738
      %764 = vmatprep.subr.bf16.mxu0 %v742
      %765 = vmatpush1.bf16.msra.mxu0 %v741
      %766 = vmatprep.subr.bf16.mxu0 %v745
      %767 = vmatpush1.bf16.msra.mxu0 %v744
      %768 = vmatprep.subr.bf16.mxu0 0
      %769 = vmatpush1.bf16.msra.mxu0 0
      %770 = vmatprep.subr.bf16.mxu0 0
      %771 = vmatpush1.bf16.msra.mxu0 0
      %772 = vmatprep.subr.bf16.mxu0 0
      %773 = vmatpush1.bf16.msra.mxu0 0
      %774 = vmatprep.subr.bf16.mxu0 0
      %775 = vmatpush1.bf16.msra.mxu0 0
      %776 = vmatprep.subr.bf16.mxu0 0
      %777 = vmatpush1.bf16.msra.mxu0 0
      %778 = vmatprep.subr.bf16.mxu0 0
      %779 = vmatpush1.bf16.msra.mxu0 0
      %780 = vmatprep.subr.bf16.mxu0 0
      %781 = vmatpush1.bf16.msra.mxu0 0
      %782 = vmatprep.subr.bf16.mxu0 0
      %783 = vmatpush1.bf16.msra.mxu0 0
      %784 = vmatprep.subr.bf16.mxu0 0
      %785 = vmatpush1.bf16.msra.mxu0 0
      %786 = vmatprep.subr.bf16.mxu0 0
      %787 = vmatpush1.bf16.msra.mxu0 0
      %788 = vmatprep.subr.bf16.mxu0 0
      %789 = vmatpush1.bf16.msra.mxu0 0
      %790 = vmatprep.mubr.bf16.mxu0 0
      %791 = vmatmul.mubr.bf16.gmra.mrb[0].mxu0 %v756
      %v792 = vpop.f32.mrb[0].mxu0
      %v793 = vadd.f32 0.0, %v792
      %v794 = vpop.f32.mrb[0].mxu0
      %v795 = vadd.f32 0.0, %v794
      %v796 = vpop.f32.mrb[0].mxu0
      %v797 = vadd.f32 0.0, %v796
      %v798 = vpop.f32.mrb[0].mxu0
      %v799 = vadd.f32 0.0, %v798
      %800 = vdwg.mxu0
      %801 = vmatprep.subr.bf16.mxu0 0
      %802 = vmatpush1.bf16.msra.mxu0 %v734
      %803 = vmatprep.subr.bf16.mxu0 0
      %804 = vmatpush1.bf16.msra.mxu0 %v737
      %805 = vmatprep.subr.bf16.mxu0 0
      %806 = vmatpush1.bf16.msra.mxu0 %v740
      %807 = vmatprep.subr.bf16.mxu0 0
      %808 = vmatpush1.bf16.msra.mxu0 %v743
      %809 = vmatprep.subr.bf16.mxu0 0
      %810 = vmatpush1.bf16.msra.mxu0 %v746
      %811 = vmatprep.subr.bf16.mxu0 0
      %812 = vmatpush1.bf16.msra.mxu0 0
      %813 = vmatprep.subr.bf16.mxu0 0
      %814 = vmatpush1.bf16.msra.mxu0 0
      %815 = vmatprep.subr.bf16.mxu0 0
      %816 = vmatpush1.bf16.msra.mxu0 0
      %817 = vmatprep.subr.bf16.mxu0 0
      %818 = vmatpush1.bf16.msra.mxu0 0
      %819 = vmatprep.subr.bf16.mxu0 0
      %820 = vmatpush1.bf16.msra.mxu0 0
      %821 = vmatprep.subr.bf16.mxu0 0
      %822 = vmatpush1.bf16.msra.mxu0 0
      %823 = vmatprep.subr.bf16.mxu0 0
      %824 = vmatpush1.bf16.msra.mxu0 0
      %825 = vmatprep.subr.bf16.mxu0 0
      %826 = vmatpush1.bf16.msra.mxu0 0
      %827 = vmatprep.subr.bf16.mxu0 0
      %828 = vmatpush1.bf16.msra.mxu0 0
      %829 = vmatprep.subr.bf16.mxu0 0
      %830 = vmatpush1.bf16.msra.mxu0 0
      %831 = vmatprep.subr.bf16.mxu0 0
      %832 = vmatpush1.bf16.msra.mxu0 0
      %833 = vmatprep.mubr.bf16.mxu0 0
      %834 = vmatmul.mubr.bf16.gmra.mrb[0].mxu0 %v756
      %v835 = vpop.f32.mrb[0].mxu0
      %v836 = vadd.f32 0.0, %v835
      %v837 = vpop.f32.mrb[0].mxu0
      %v838 = vpop.f32.mrb[0].mxu0
      %v839 = vadd.f32 0.0, %v838
      %v840 = vpop.f32.mrb[0].mxu0
      %841 = vdwg.mxu0
      %v842 = vld [vmem:[#allocation4] sm:$0xff]
      %v843 = vld [vmem:[#allocation4 + $0x8] sm:$0xff]
      %v844 = vld [vmem:[#allocation4 + $0x10] sm:$0xff]
      %v845 = vld [vmem:[#allocation4 + $0x18] sm:$0xff]
      %v846 = vld [vmem:[#allocation4 + $0x20] sm:$0xff]
      %v847 = vld [vmem:[#allocation4 + $0x28] sm:$0xff]
      %v848 = vadd.f32 %v842, %v793
      %v849 = vadd.f32 %v843, %v795
      %v850 = vadd.f32 %v844, %v836
      %v851 = vadd.f32 %v845, %v797
      %v852 = vadd.f32 %v846, %v799
      %v853 = vadd.f32 %v847, %v839
      %854 = vst [vmem:[#allocation4] sm:$0xff] %v848
      %855 = vst [vmem:[#allocation4 + $0x8] sm:$0xff] %v849
      %856 = vst [vmem:[#allocation4 + $0x10] sm:$0xff] %v850
      %857 = vst [vmem:[#allocation4 + $0x18] sm:$0xff] %v851
      %858 = vst [vmem:[#allocation4 + $0x20] sm:$0xff] %v852
      %859 = vst [vmem:[#allocation4 + $0x28] sm:$0xff] %v853
      %v860 = vld [vmem:[#allocation4] sm:$0xff]
      %v861 = vld [vmem:[#allocation4 + $0x8] sm:$0xff]
      %v862 = vld [vmem:[#allocation4 + $0x10] sm:$0xff]
      %v863 = vld [vmem:[#allocation4 + $0x18] sm:$0xff]
      %v864 = vld [vmem:[#allocation4 + $0x20] sm:$0xff]
      %v865 = vld [vmem:[#allocation4 + $0x28] sm:$0xff]
      %v866 = vld [vmem:[%s2] sm:$0xff]
      %v867 = vld [vmem:[%s2 + $0x8] sm:$0xff]
      %869 = vset.pattern.permute.xlu0 0
      %870 = vperm.xlu0 %869, %v866
      %v871 = vpop.permute.xlu0 %870
      %874 = vset.pattern.permute.xlu0 0
      %875 = vperm.xlu0 %874, %v867
      %v876 = vpop.permute.xlu0 %875
      %v878 = vadd.f32 %v860, %v871
      %v879 = vadd.f32 %v861, %v871
      %v880 = vadd.f32 %v862, %v871
      %v881 = vadd.f32 %v863, %v876
      %v882 = vadd.f32 %v864, %v876
      %v883 = vadd.f32 %v865, %v876
      %884 = vst [vmem:[%s157] sm:$0xff] %v878
      %885 = vst [vmem:[%s157 + $0x8] sm:$0xff] %v879
      %886 = vst [vmem:[%s157 + $0x10] sm:$0xff] %v880
      %887 = vst [vmem:[%s157 + $0x18] sm:$0xff] %v881
      %888 = vst [vmem:[%s157 + $0x20] sm:$0xff] %v882
      %889 = vst [vmem:[%s157 + $0x28] sm:$0xff] %v883
      %s890 = sadd.s32 %s20, %s21
      %s891 = smul.u32 3, %s890
      %p892 = scmp.lt.s32.totalorder %s19, 1
      %s893 = scalar_select %p892, %s19, 1
      %p894 = scmp.lt.s32.totalorder %s891, 2
      %s895 = scalar_select %p894, %s891, 2
      %s896 = smul.addr %s893, 6
      %s897 = sadd.s32 %s895, %s896
      %s898 = smul.addr %s897, 8
      %s899 = scalar_lea.vmem %s3, %s898
      // Predicated region
      $region111: #{meta_conv2d.1} parent=27 // pred_check
        %p900 = pneg %p97
      $region112: #{meta_conv2d.1} parent=27 // pred_check_branch
        %902 = sbr.rel (%p900) target = $region114
      $region113: #{meta_conv2d.1} parent=27 // pred_region
        %s903 = sadd.s32 %s20, %s21
        %s904 = smul.u32 3, %s903
      $region114: #{meta_conv2d.1} parent=27 // pred_fallthru
        _
    $region28: #{meta_conv2d.1} parent=5 // pred_fallthru
      _
    %p905 = scmp.le.s32.totalorder 2, %s9
    // Predicated region
    $region115: #{meta_conv2d.1} parent=5 // pred_check
      %p906 = pneg %p905
    $region116: #{meta_conv2d.1} parent=5 // pred_check_branch
      %908 = sbr.rel (%p906) target = $region118
    $region117: #{meta_conv2d.1} parent=5 // pred_region
      %s909 = ssub.s32 %s9, 2
      // Predicated region
      $region119: #{meta_conv2d.1} parent=117 // pred_check
        %p910 = pneg %p103
      $region120: #{meta_conv2d.1} parent=117 // pred_check_branch
        %912 = sbr.rel (%p910) target = $region122
      $region121: #{meta_conv2d.1} parent=117 // pred_region
        %s913 = sadd.s32 %s23, %s24
        %s914 = smul.u32 3, %s913
        %p915 = scmp.lt.s32.totalorder %s22, 1
        %s916 = scalar_select %p915, %s22, 1
        %p917 = scmp.lt.s32.totalorder %s914, 2
        %s918 = scalar_select %p917, %s914, 2
        %s919 = smul.addr %s916, 6
        %s920 = sadd.s32 %s918, %s919
        %s921 = smul.addr %s920, 8
        %s922 = scalar_lea.vmem %s3, %s921
      $region122: #{meta_conv2d.1} parent=117 // pred_fallthru
        _
    $region118: #{meta_conv2d.1} parent=5 // pred_fallthru
      _
  $region6: #{meta_conv2d.1} parent=0 // loop_footer
    %s13 = sadd.s32 1, %s9
  $region7: #{meta_conv2d.1} parent=0 // loop_footer_branch
    %8 = sbr.rel target = $region3
  $region8: #{meta_conv2d.1} parent=0 // loop_exit
    _
  %923 = vsyncmov [#allocation5]
  %s924 = vpop.sfrf %923
  %p925 = scmp.eq.s32.totalorder %s924, 0
  %p926 = pneg %p925
  %928 = shalt.err (%p926)
  %s929 = scalar_lea.sflag [#allocation5], 1
  %930 = vsyncmov %s929
  %s931 = vpop.sfrf %930
  %p932 = scmp.eq.s32.totalorder %s931, 0
  %p933 = pneg %p932
  %935 = shalt.err (%p933)

</llo_original>
